<compile_context>
chip_gen: v7x
topology: tpu7x:2x2x1
jax: 0.10.0
libtpu: 0.0.40
codegen_flags: <defaults>
</compile_context>

<pallas_src>
import functools

import jax
import jax.numpy as jnp
from jax.experimental import pallas as pl
from jax.experimental.pallas import tpu as pltpu


def lfa_kernel(wst_ref, cnn_ref, w1a_ref, w1b_ref, w2_ref, mask_ref, out_ref,
               *, N, C, Cmid, H, W):
    # Block views:
    #   wst_ref / cnn_ref / out_ref : (N*C, HW)   VMEM, lane axis = flattened HW
    #   w1a_ref / w1b_ref           : (Cmid*C,)   SMEM, index m*C + c
    #   w2_ref                      : (C*9*Cmid,) SMEM, index (co*9 + dy*3+dx)*Cmid + m
    #   mask_ref                    : (8, HW)     VMEM, 0/1 boundary masks (off-center taps)
    HW = H * W

    wst = wst_ref[...].astype(jnp.float32)        # (N*C, HW)
    cnn = cnn_ref[...].astype(jnp.float32)        # (N*C, HW)
    masks = mask_ref[...]                         # (8, HW) f32

    # Hoist all weights out of SMEM once (scalar sreg reads, splat on use).
    w1a = [w1a_ref[i] for i in range(Cmid * C)]
    w1b = [w1b_ref[i] for i in range(Cmid * C)]
    w2 = [w2_ref[i] for i in range(C * 9 * Cmid)]

    # ---- conv1 (1x1) + ReLU, both batches stacked: (N*Cmid, HW), stays in vregs ----
    a1_rows = []
    for n in range(N):
        for m in range(Cmid):
            acc = None
            for c in range(C):
                term = (w1a[m * C + c] * wst[n * C + c:n * C + c + 1]
                        + w1b[m * C + c] * cnn[n * C + c:n * C + c + 1])
                acc = term if acc is None else acc + term
            a1_rows.append(jnp.maximum(acc, 0.0))
    a1 = jnp.concatenate(a1_rows, axis=0)         # (N*Cmid, HW) f32

    # ---- conv2 (3x3, padding=1): 9 rolled taps + boundary masks (no scratch) ----
    # Tap (dy, dx) needs out[p] = a1[p + off] with off = (dy-1)*W + (dx-1);
    # pltpu.roll(x, s)[p] = x[(p - s) mod HW], so s = (-off) mod HW.  Wrapped
    # reads are zeroed by the precomputed per-tap mask.
    taps = []
    for dy in range(3):
        for dx in range(3):
            t = dy * 3 + dx
            off = (dy - 1) * W + (dx - 1)
            sh = a1 if off == 0 else pltpu.roll(a1, shift=(-off) % HW, axis=1)
            if t != 4:                            # center tap never out of bounds
                mrow = t if t < 4 else t - 1
                sh = sh * masks[mrow:mrow + 1]
            taps.append(sh)

    # ---- per-output-channel accumulation (scalar-splat VPU MACs) ----
    acc_rows = []
    for n in range(N):
        for co in range(C):
            acc = None
            for t in range(9):
                for m in range(Cmid):
                    term = (w2[(co * 9 + t) * Cmid + m]
                            * taps[t][n * Cmid + m:n * Cmid + m + 1])
                    acc = term if acc is None else acc + term
            acc_rows.append(acc)
    pre = jnp.concatenate(acc_rows, axis=0)       # (N*C, HW)

    attn = jax.nn.sigmoid(pre)                    # EUP
    out_ref[...] = (attn * cnn + wst).astype(out_ref.dtype)


def lfa_forward(wst_low, cnn_spatial, w1, w2):
    """wst_low, cnn_spatial: (N, C, H, W) float32 (NCHW, PyTorch layout).
    w1: (C//2, 2C, 1, 1) torch 1x1 conv weight.  w2: (C, C//2, 3, 3) torch 3x3 conv weight."""
    N, C, H, W = wst_low.shape
    Cmid = w1.shape[0]
    HW = H * W
    assert HW % 128 == 0, "lane-dense layout assumes H*W is a multiple of 128"

    # Free, contiguous reshapes (no transpose, no extra HBM pass).
    wst_f = wst_low.reshape(N * C, HW)
    cnn_f = cnn_spatial.reshape(N * C, HW)

    # Split the 1x1 weight: first C input channels act on wst_low, last C on cnn_spatial.
    w1_mat = w1[:, :, 0, 0]                       # (Cmid, 2C)
    w1a = w1_mat[:, :C].reshape(-1)               # (Cmid*C,), index m*C + c
    w1b = w1_mat[:, C:].reshape(-1)
    # 3x3 weight flattened with index (co*9 + dy*3+dx)*Cmid + m.
    w2_flat = jnp.transpose(w2, (0, 2, 3, 1)).reshape(-1)

    # (8, HW) boundary masks for the 8 off-center taps (row = t if t<4 else t-1).
    idx = jnp.arange(HW, dtype=jnp.int32)
    hh = idx // W
    ww = idx % W

    def tap_mask(dy, dx):
        m = jnp.ones((HW,), dtype=jnp.bool_)
        if dy == 0:
            m = m & (hh >= 1)
        if dy == 2:
            m = m & (hh <= H - 2)
        if dx == 0:
            m = m & (ww >= 1)
        if dx == 2:
            m = m & (ww <= W - 2)
        return m.astype(jnp.float32)

    mask_rows = [tap_mask(dy, dx) for dy in range(3) for dx in range(3)
                 if not (dy == 1 and dx == 1)]
    masks = jnp.stack(mask_rows, axis=0)          # (8, HW)

    kernel = functools.partial(lfa_kernel, N=N, C=C, Cmid=Cmid, H=H, W=W)

    out_flat = pl.pallas_call(
        kernel,
        out_shape=jax.ShapeDtypeStruct((N * C, HW), wst_low.dtype),
        grid=(1,),                                # single step; latency-bound op
        in_specs=[
            pl.BlockSpec((N * C, HW), lambda i: (0, 0)),
            pl.BlockSpec((N * C, HW), lambda i: (0, 0)),
            pl.BlockSpec(memory_space=pltpu.MemorySpace.SMEM),
            pl.BlockSpec(memory_space=pltpu.MemorySpace.SMEM),
            pl.BlockSpec(memory_space=pltpu.MemorySpace.SMEM),
            pl.BlockSpec((8, HW), lambda i: (0, 0)),
        ],
        out_specs=pl.BlockSpec((N * C, HW), lambda i: (0, 0)),
        compiler_params=pltpu.CompilerParams(
            dimension_semantics=("arbitrary",)),  # single core; no megacore split needed
    )(wst_f, cnn_f, w1a, w1b, w2_flat, masks)

    return out_flat.reshape(N, C, H, W)


def lfa_reference(wst_low, cnn_spatial, w1, w2):
    """Plain-JAX reference matching the PyTorch forward (NCHW)."""
    fusion = jnp.concatenate([wst_low, cnn_spatial], axis=1)
    a = jax.lax.conv_general_dilated(
        fusion, w1, window_strides=(1, 1), padding="VALID",
        dimension_numbers=("NCHW", "OIHW", "NCHW"))
    a = jnp.maximum(a, 0.0)
    a = jax.lax.conv_general_dilated(
        a, w2, window_strides=(1, 1), padding=((1, 1), (1, 1)),
        dimension_numbers=("NCHW", "OIHW", "NCHW"))
    attn = jax.nn.sigmoid(a)
    return attn * cnn_spatial + wst_low


if __name__ == "__main__":
    # Small shapes consistent with the module: batch=2, in_channels=4, 16x16 spatial.
    N, C, H, W = 2, 4, 16, 16
    Cmid = C // 2

    key = jax.random.PRNGKey(0)
    k1, k2, k3, k4 = jax.random.split(key, 4)
    wst_low = jax.random.normal(k1, (N, C, H, W), dtype=jnp.float32)
    cnn_spatial = jax.random.normal(k2, (N, C, H, W), dtype=jnp.float32)
    # Deterministic Kaiming-ish init for the two conv weights (no bias).
    w1 = jax.random.normal(k3, (Cmid, 2 * C, 1, 1), dtype=jnp.float32) * (2.0 / (2 * C)) ** 0.5
    w2 = jax.random.normal(k4, (C, Cmid, 3, 3), dtype=jnp.float32) * (2.0 / (Cmid * 9)) ** 0.5

    out = jax.block_until_ready(lfa_forward(wst_low, cnn_spatial, w1, w2))
    ref = jax.block_until_ready(lfa_reference(wst_low, cnn_spatial, w1, w2))

    assert out.shape == (N, C, H, W)
    assert jnp.allclose(out, ref, atol=1e-4, rtol=1e-4), "mismatch vs reference"
    print("KERNEL_OK")
</pallas_src>

<mosaic_0001>
module attributes {stable_mosaic.version = 11 : i64} {
  func.func @lfa_kernel(%arg0: i32, %arg1: memref<8x256xf32, #tpu.memory_space<vmem>>, %arg2: memref<8x256xf32, #tpu.memory_space<vmem>>, %arg3: memref<8xf32, #tpu.memory_space<smem>>, %arg4: memref<8xf32, #tpu.memory_space<smem>>, %arg5: memref<72xf32, #tpu.memory_space<smem>>, %arg6: memref<8x256xf32, #tpu.memory_space<vmem>>, %arg7: memref<8x256xf32, #tpu.memory_space<vmem>>) attributes {dimension_semantics = [#tpu.dimension_semantics<arbitrary>], iteration_bounds = array<i64: 1>, scalar_prefetch = 0 : i64, scratch_operands = 0 : i64, tpu.core_type = #tpu.core_type<tc>, window_params = [{pipeline_mode = #tpu.pipeline_mode<synchronous>, transform_indices = @transform_0, window_bounds = array<i64: 8, 256>}, {pipeline_mode = #tpu.pipeline_mode<synchronous>, transform_indices = @transform_1, window_bounds = array<i64: 8, 256>}, {transform_indices = @transform_2, window_bounds = array<i64: 8>}, {transform_indices = @transform_3, window_bounds = array<i64: 8>}, {transform_indices = @transform_4, window_bounds = array<i64: 72>}, {pipeline_mode = #tpu.pipeline_mode<synchronous>, transform_indices = @transform_5, window_bounds = array<i64: 8, 256>}, {pipeline_mode = #tpu.pipeline_mode<synchronous>, transform_indices = @transform_6, window_bounds = array<i64: 8, 256>}]} {
    %c0 = arith.constant 0 : index
    %c0_0 = arith.constant 0 : index
    %0 = vector.load %arg1[%c0, %c0_0] : memref<8x256xf32, #tpu.memory_space<vmem>>, vector<8x256xf32>
    %c0_1 = arith.constant 0 : index
    %c0_2 = arith.constant 0 : index
    %1 = vector.load %arg2[%c0_1, %c0_2] : memref<8x256xf32, #tpu.memory_space<vmem>>, vector<8x256xf32>
    %c0_3 = arith.constant 0 : index
    %c0_4 = arith.constant 0 : index
    %2 = vector.load %arg6[%c0_3, %c0_4] : memref<8x256xf32, #tpu.memory_space<vmem>>, vector<8x256xf32>
    %c0_5 = arith.constant 0 : index
    %3 = memref.load %arg3[%c0_5] : memref<8xf32, #tpu.memory_space<smem>>
    %c1 = arith.constant 1 : index
    %4 = memref.load %arg3[%c1] : memref<8xf32, #tpu.memory_space<smem>>
    %c2 = arith.constant 2 : index
    %5 = memref.load %arg3[%c2] : memref<8xf32, #tpu.memory_space<smem>>
    %c3 = arith.constant 3 : index
    %6 = memref.load %arg3[%c3] : memref<8xf32, #tpu.memory_space<smem>>
    %c4 = arith.constant 4 : index
    %7 = memref.load %arg3[%c4] : memref<8xf32, #tpu.memory_space<smem>>
    %c5 = arith.constant 5 : index
    %8 = memref.load %arg3[%c5] : memref<8xf32, #tpu.memory_space<smem>>
    %c6 = arith.constant 6 : index
    %9 = memref.load %arg3[%c6] : memref<8xf32, #tpu.memory_space<smem>>
    %c7 = arith.constant 7 : index
    %10 = memref.load %arg3[%c7] : memref<8xf32, #tpu.memory_space<smem>>
    %c0_6 = arith.constant 0 : index
    %11 = memref.load %arg4[%c0_6] : memref<8xf32, #tpu.memory_space<smem>>
    %c1_7 = arith.constant 1 : index
    %12 = memref.load %arg4[%c1_7] : memref<8xf32, #tpu.memory_space<smem>>
    %c2_8 = arith.constant 2 : index
    %13 = memref.load %arg4[%c2_8] : memref<8xf32, #tpu.memory_space<smem>>
    %c3_9 = arith.constant 3 : index
    %14 = memref.load %arg4[%c3_9] : memref<8xf32, #tpu.memory_space<smem>>
    %c4_10 = arith.constant 4 : index
    %15 = memref.load %arg4[%c4_10] : memref<8xf32, #tpu.memory_space<smem>>
    %c5_11 = arith.constant 5 : index
    %16 = memref.load %arg4[%c5_11] : memref<8xf32, #tpu.memory_space<smem>>
    %c6_12 = arith.constant 6 : index
    %17 = memref.load %arg4[%c6_12] : memref<8xf32, #tpu.memory_space<smem>>
    %c7_13 = arith.constant 7 : index
    %18 = memref.load %arg4[%c7_13] : memref<8xf32, #tpu.memory_space<smem>>
    %c0_14 = arith.constant 0 : index
    %19 = memref.load %arg5[%c0_14] : memref<72xf32, #tpu.memory_space<smem>>
    %c1_15 = arith.constant 1 : index
    %20 = memref.load %arg5[%c1_15] : memref<72xf32, #tpu.memory_space<smem>>
    %c2_16 = arith.constant 2 : index
    %21 = memref.load %arg5[%c2_16] : memref<72xf32, #tpu.memory_space<smem>>
    %c3_17 = arith.constant 3 : index
    %22 = memref.load %arg5[%c3_17] : memref<72xf32, #tpu.memory_space<smem>>
    %c4_18 = arith.constant 4 : index
    %23 = memref.load %arg5[%c4_18] : memref<72xf32, #tpu.memory_space<smem>>
    %c5_19 = arith.constant 5 : index
    %24 = memref.load %arg5[%c5_19] : memref<72xf32, #tpu.memory_space<smem>>
    %c6_20 = arith.constant 6 : index
    %25 = memref.load %arg5[%c6_20] : memref<72xf32, #tpu.memory_space<smem>>
    %c7_21 = arith.constant 7 : index
    %26 = memref.load %arg5[%c7_21] : memref<72xf32, #tpu.memory_space<smem>>
    %c8 = arith.constant 8 : index
    %27 = memref.load %arg5[%c8] : memref<72xf32, #tpu.memory_space<smem>>
    %c9 = arith.constant 9 : index
    %28 = memref.load %arg5[%c9] : memref<72xf32, #tpu.memory_space<smem>>
    %c10 = arith.constant 10 : index
    %29 = memref.load %arg5[%c10] : memref<72xf32, #tpu.memory_space<smem>>
    %c11 = arith.constant 11 : index
    %30 = memref.load %arg5[%c11] : memref<72xf32, #tpu.memory_space<smem>>
    %c12 = arith.constant 12 : index
    %31 = memref.load %arg5[%c12] : memref<72xf32, #tpu.memory_space<smem>>
    %c13 = arith.constant 13 : index
    %32 = memref.load %arg5[%c13] : memref<72xf32, #tpu.memory_space<smem>>
    %c14 = arith.constant 14 : index
    %33 = memref.load %arg5[%c14] : memref<72xf32, #tpu.memory_space<smem>>
    %c15 = arith.constant 15 : index
    %34 = memref.load %arg5[%c15] : memref<72xf32, #tpu.memory_space<smem>>
    %c16 = arith.constant 16 : index
    %35 = memref.load %arg5[%c16] : memref<72xf32, #tpu.memory_space<smem>>
    %c17 = arith.constant 17 : index
    %36 = memref.load %arg5[%c17] : memref<72xf32, #tpu.memory_space<smem>>
    %c18 = arith.constant 18 : index
    %37 = memref.load %arg5[%c18] : memref<72xf32, #tpu.memory_space<smem>>
    %c19 = arith.constant 19 : index
    %38 = memref.load %arg5[%c19] : memref<72xf32, #tpu.memory_space<smem>>
    %c20 = arith.constant 20 : index
    %39 = memref.load %arg5[%c20] : memref<72xf32, #tpu.memory_space<smem>>
    %c21 = arith.constant 21 : index
    %40 = memref.load %arg5[%c21] : memref<72xf32, #tpu.memory_space<smem>>
    %c22 = arith.constant 22 : index
    %41 = memref.load %arg5[%c22] : memref<72xf32, #tpu.memory_space<smem>>
    %c23 = arith.constant 23 : index
    %42 = memref.load %arg5[%c23] : memref<72xf32, #tpu.memory_space<smem>>
    %c24 = arith.constant 24 : index
    %43 = memref.load %arg5[%c24] : memref<72xf32, #tpu.memory_space<smem>>
    %c25 = arith.constant 25 : index
    %44 = memref.load %arg5[%c25] : memref<72xf32, #tpu.memory_space<smem>>
    %c26 = arith.constant 26 : index
    %45 = memref.load %arg5[%c26] : memref<72xf32, #tpu.memory_space<smem>>
    %c27 = arith.constant 27 : index
    %46 = memref.load %arg5[%c27] : memref<72xf32, #tpu.memory_space<smem>>
    %c28 = arith.constant 28 : index
    %47 = memref.load %arg5[%c28] : memref<72xf32, #tpu.memory_space<smem>>
    %c29 = arith.constant 29 : index
    %48 = memref.load %arg5[%c29] : memref<72xf32, #tpu.memory_space<smem>>
    %c30 = arith.constant 30 : index
    %49 = memref.load %arg5[%c30] : memref<72xf32, #tpu.memory_space<smem>>
    %c31 = arith.constant 31 : index
    %50 = memref.load %arg5[%c31] : memref<72xf32, #tpu.memory_space<smem>>
    %c32 = arith.constant 32 : index
    %51 = memref.load %arg5[%c32] : memref<72xf32, #tpu.memory_space<smem>>
    %c33 = arith.constant 33 : index
    %52 = memref.load %arg5[%c33] : memref<72xf32, #tpu.memory_space<smem>>
    %c34 = arith.constant 34 : index
    %53 = memref.load %arg5[%c34] : memref<72xf32, #tpu.memory_space<smem>>
    %c35 = arith.constant 35 : index
    %54 = memref.load %arg5[%c35] : memref<72xf32, #tpu.memory_space<smem>>
    %c36 = arith.constant 36 : index
    %55 = memref.load %arg5[%c36] : memref<72xf32, #tpu.memory_space<smem>>
    %c37 = arith.constant 37 : index
    %56 = memref.load %arg5[%c37] : memref<72xf32, #tpu.memory_space<smem>>
    %c38 = arith.constant 38 : index
    %57 = memref.load %arg5[%c38] : memref<72xf32, #tpu.memory_space<smem>>
    %c39 = arith.constant 39 : index
    %58 = memref.load %arg5[%c39] : memref<72xf32, #tpu.memory_space<smem>>
    %c40 = arith.constant 40 : index
    %59 = memref.load %arg5[%c40] : memref<72xf32, #tpu.memory_space<smem>>
    %c41 = arith.constant 41 : index
    %60 = memref.load %arg5[%c41] : memref<72xf32, #tpu.memory_space<smem>>
    %c42 = arith.constant 42 : index
    %61 = memref.load %arg5[%c42] : memref<72xf32, #tpu.memory_space<smem>>
    %c43 = arith.constant 43 : index
    %62 = memref.load %arg5[%c43] : memref<72xf32, #tpu.memory_space<smem>>
    %c44 = arith.constant 44 : index
    %63 = memref.load %arg5[%c44] : memref<72xf32, #tpu.memory_space<smem>>
    %c45 = arith.constant 45 : index
    %64 = memref.load %arg5[%c45] : memref<72xf32, #tpu.memory_space<smem>>
    %c46 = arith.constant 46 : index
    %65 = memref.load %arg5[%c46] : memref<72xf32, #tpu.memory_space<smem>>
    %c47 = arith.constant 47 : index
    %66 = memref.load %arg5[%c47] : memref<72xf32, #tpu.memory_space<smem>>
    %c48 = arith.constant 48 : index
    %67 = memref.load %arg5[%c48] : memref<72xf32, #tpu.memory_space<smem>>
    %c49 = arith.constant 49 : index
    %68 = memref.load %arg5[%c49] : memref<72xf32, #tpu.memory_space<smem>>
    %c50 = arith.constant 50 : index
    %69 = memref.load %arg5[%c50] : memref<72xf32, #tpu.memory_space<smem>>
    %c51 = arith.constant 51 : index
    %70 = memref.load %arg5[%c51] : memref<72xf32, #tpu.memory_space<smem>>
    %c52 = arith.constant 52 : index
    %71 = memref.load %arg5[%c52] : memref<72xf32, #tpu.memory_space<smem>>
    %c53 = arith.constant 53 : index
    %72 = memref.load %arg5[%c53] : memref<72xf32, #tpu.memory_space<smem>>
    %c54 = arith.constant 54 : index
    %73 = memref.load %arg5[%c54] : memref<72xf32, #tpu.memory_space<smem>>
    %c55 = arith.constant 55 : index
    %74 = memref.load %arg5[%c55] : memref<72xf32, #tpu.memory_space<smem>>
    %c56 = arith.constant 56 : index
    %75 = memref.load %arg5[%c56] : memref<72xf32, #tpu.memory_space<smem>>
    %c57 = arith.constant 57 : index
    %76 = memref.load %arg5[%c57] : memref<72xf32, #tpu.memory_space<smem>>
    %c58 = arith.constant 58 : index
    %77 = memref.load %arg5[%c58] : memref<72xf32, #tpu.memory_space<smem>>
    %c59 = arith.constant 59 : index
    %78 = memref.load %arg5[%c59] : memref<72xf32, #tpu.memory_space<smem>>
    %c60 = arith.constant 60 : index
    %79 = memref.load %arg5[%c60] : memref<72xf32, #tpu.memory_space<smem>>
    %c61 = arith.constant 61 : index
    %80 = memref.load %arg5[%c61] : memref<72xf32, #tpu.memory_space<smem>>
    %c62 = arith.constant 62 : index
    %81 = memref.load %arg5[%c62] : memref<72xf32, #tpu.memory_space<smem>>
    %c63 = arith.constant 63 : index
    %82 = memref.load %arg5[%c63] : memref<72xf32, #tpu.memory_space<smem>>
    %c64 = arith.constant 64 : index
    %83 = memref.load %arg5[%c64] : memref<72xf32, #tpu.memory_space<smem>>
    %c65 = arith.constant 65 : index
    %84 = memref.load %arg5[%c65] : memref<72xf32, #tpu.memory_space<smem>>
    %c66 = arith.constant 66 : index
    %85 = memref.load %arg5[%c66] : memref<72xf32, #tpu.memory_space<smem>>
    %c67 = arith.constant 67 : index
    %86 = memref.load %arg5[%c67] : memref<72xf32, #tpu.memory_space<smem>>
    %c68 = arith.constant 68 : index
    %87 = memref.load %arg5[%c68] : memref<72xf32, #tpu.memory_space<smem>>
    %c69 = arith.constant 69 : index
    %88 = memref.load %arg5[%c69] : memref<72xf32, #tpu.memory_space<smem>>
    %c70 = arith.constant 70 : index
    %89 = memref.load %arg5[%c70] : memref<72xf32, #tpu.memory_space<smem>>
    %c71 = arith.constant 71 : index
    %90 = memref.load %arg5[%c71] : memref<72xf32, #tpu.memory_space<smem>>
    %91 = vector.extract_strided_slice %0 {offsets = [0, 0], sizes = [1, 256], strides = [1, 1]} : vector<8x256xf32> to vector<1x256xf32>
    %92 = vector.broadcast %3 : f32 to vector<1x256xf32>
    %93 = arith.mulf %92, %91 : vector<1x256xf32>
    %94 = vector.extract_strided_slice %1 {offsets = [0, 0], sizes = [1, 256], strides = [1, 1]} : vector<8x256xf32> to vector<1x256xf32>
    %95 = vector.broadcast %11 : f32 to vector<1x256xf32>
    %96 = arith.mulf %95, %94 : vector<1x256xf32>
    %97 = arith.addf %93, %96 : vector<1x256xf32>
    %98 = vector.extract_strided_slice %0 {offsets = [1, 0], sizes = [1, 256], strides = [1, 1]} : vector<8x256xf32> to vector<1x256xf32>
    %99 = vector.broadcast %4 : f32 to vector<1x256xf32>
    %100 = arith.mulf %99, %98 : vector<1x256xf32>
    %101 = vector.extract_strided_slice %1 {offsets = [1, 0], sizes = [1, 256], strides = [1, 1]} : vector<8x256xf32> to vector<1x256xf32>
    %102 = vector.broadcast %12 : f32 to vector<1x256xf32>
    %103 = arith.mulf %102, %101 : vector<1x256xf32>
    %104 = arith.addf %100, %103 : vector<1x256xf32>
    %105 = arith.addf %97, %104 : vector<1x256xf32>
    %106 = vector.extract_strided_slice %0 {offsets = [2, 0], sizes = [1, 256], strides = [1, 1]} : vector<8x256xf32> to vector<1x256xf32>
    %107 = vector.broadcast %5 : f32 to vector<1x256xf32>
    %108 = arith.mulf %107, %106 : vector<1x256xf32>
    %109 = vector.extract_strided_slice %1 {offsets = [2, 0], sizes = [1, 256], strides = [1, 1]} : vector<8x256xf32> to vector<1x256xf32>
    %110 = vector.broadcast %13 : f32 to vector<1x256xf32>
    %111 = arith.mulf %110, %109 : vector<1x256xf32>
    %112 = arith.addf %108, %111 : vector<1x256xf32>
    %113 = arith.addf %105, %112 : vector<1x256xf32>
    %114 = vector.extract_strided_slice %0 {offsets = [3, 0], sizes = [1, 256], strides = [1, 1]} : vector<8x256xf32> to vector<1x256xf32>
    %115 = vector.broadcast %6 : f32 to vector<1x256xf32>
    %116 = arith.mulf %115, %114 : vector<1x256xf32>
    %117 = vector.extract_strided_slice %1 {offsets = [3, 0], sizes = [1, 256], strides = [1, 1]} : vector<8x256xf32> to vector<1x256xf32>
    %118 = vector.broadcast %14 : f32 to vector<1x256xf32>
    %119 = arith.mulf %118, %117 : vector<1x256xf32>
    %120 = arith.addf %116, %119 : vector<1x256xf32>
    %121 = arith.addf %113, %120 : vector<1x256xf32>
    %cst = arith.constant 0.000000e+00 : f32
    %122 = vector.broadcast %cst : f32 to vector<1x256xf32>
    %123 = arith.maximumf %121, %122 : vector<1x256xf32>
    %124 = vector.extract_strided_slice %0 {offsets = [0, 0], sizes = [1, 256], strides = [1, 1]} : vector<8x256xf32> to vector<1x256xf32>
    %125 = vector.broadcast %7 : f32 to vector<1x256xf32>
    %126 = arith.mulf %125, %124 : vector<1x256xf32>
    %127 = vector.extract_strided_slice %1 {offsets = [0, 0], sizes = [1, 256], strides = [1, 1]} : vector<8x256xf32> to vector<1x256xf32>
    %128 = vector.broadcast %15 : f32 to vector<1x256xf32>
    %129 = arith.mulf %128, %127 : vector<1x256xf32>
    %130 = arith.addf %126, %129 : vector<1x256xf32>
    %131 = vector.extract_strided_slice %0 {offsets = [1, 0], sizes = [1, 256], strides = [1, 1]} : vector<8x256xf32> to vector<1x256xf32>
    %132 = vector.broadcast %8 : f32 to vector<1x256xf32>
    %133 = arith.mulf %132, %131 : vector<1x256xf32>
    %134 = vector.extract_strided_slice %1 {offsets = [1, 0], sizes = [1, 256], strides = [1, 1]} : vector<8x256xf32> to vector<1x256xf32>
    %135 = vector.broadcast %16 : f32 to vector<1x256xf32>
    %136 = arith.mulf %135, %134 : vector<1x256xf32>
    %137 = arith.addf %133, %136 : vector<1x256xf32>
    %138 = arith.addf %130, %137 : vector<1x256xf32>
    %139 = vector.extract_strided_slice %0 {offsets = [2, 0], sizes = [1, 256], strides = [1, 1]} : vector<8x256xf32> to vector<1x256xf32>
    %140 = vector.broadcast %9 : f32 to vector<1x256xf32>
    %141 = arith.mulf %140, %139 : vector<1x256xf32>
    %142 = vector.extract_strided_slice %1 {offsets = [2, 0], sizes = [1, 256], strides = [1, 1]} : vector<8x256xf32> to vector<1x256xf32>
    %143 = vector.broadcast %17 : f32 to vector<1x256xf32>
    %144 = arith.mulf %143, %142 : vector<1x256xf32>
    %145 = arith.addf %141, %144 : vector<1x256xf32>
    %146 = arith.addf %138, %145 : vector<1x256xf32>
    %147 = vector.extract_strided_slice %0 {offsets = [3, 0], sizes = [1, 256], strides = [1, 1]} : vector<8x256xf32> to vector<1x256xf32>
    %148 = vector.broadcast %10 : f32 to vector<1x256xf32>
    %149 = arith.mulf %148, %147 : vector<1x256xf32>
    %150 = vector.extract_strided_slice %1 {offsets = [3, 0], sizes = [1, 256], strides = [1, 1]} : vector<8x256xf32> to vector<1x256xf32>
    %151 = vector.broadcast %18 : f32 to vector<1x256xf32>
    %152 = arith.mulf %151, %150 : vector<1x256xf32>
    %153 = arith.addf %149, %152 : vector<1x256xf32>
    %154 = arith.addf %146, %153 : vector<1x256xf32>
    %cst_22 = arith.constant 0.000000e+00 : f32
    %155 = vector.broadcast %cst_22 : f32 to vector<1x256xf32>
    %156 = arith.maximumf %154, %155 : vector<1x256xf32>
    %157 = vector.extract_strided_slice %0 {offsets = [4, 0], sizes = [1, 256], strides = [1, 1]} : vector<8x256xf32> to vector<1x256xf32>
    %158 = vector.broadcast %3 : f32 to vector<1x256xf32>
    %159 = arith.mulf %158, %157 : vector<1x256xf32>
    %160 = vector.extract_strided_slice %1 {offsets = [4, 0], sizes = [1, 256], strides = [1, 1]} : vector<8x256xf32> to vector<1x256xf32>
    %161 = vector.broadcast %11 : f32 to vector<1x256xf32>
    %162 = arith.mulf %161, %160 : vector<1x256xf32>
    %163 = arith.addf %159, %162 : vector<1x256xf32>
    %164 = vector.extract_strided_slice %0 {offsets = [5, 0], sizes = [1, 256], strides = [1, 1]} : vector<8x256xf32> to vector<1x256xf32>
    %165 = vector.broadcast %4 : f32 to vector<1x256xf32>
    %166 = arith.mulf %165, %164 : vector<1x256xf32>
    %167 = vector.extract_strided_slice %1 {offsets = [5, 0], sizes = [1, 256], strides = [1, 1]} : vector<8x256xf32> to vector<1x256xf32>
    %168 = vector.broadcast %12 : f32 to vector<1x256xf32>
    %169 = arith.mulf %168, %167 : vector<1x256xf32>
    %170 = arith.addf %166, %169 : vector<1x256xf32>
    %171 = arith.addf %163, %170 : vector<1x256xf32>
    %172 = vector.extract_strided_slice %0 {offsets = [6, 0], sizes = [1, 256], strides = [1, 1]} : vector<8x256xf32> to vector<1x256xf32>
    %173 = vector.broadcast %5 : f32 to vector<1x256xf32>
    %174 = arith.mulf %173, %172 : vector<1x256xf32>
    %175 = vector.extract_strided_slice %1 {offsets = [6, 0], sizes = [1, 256], strides = [1, 1]} : vector<8x256xf32> to vector<1x256xf32>
    %176 = vector.broadcast %13 : f32 to vector<1x256xf32>
    %177 = arith.mulf %176, %175 : vector<1x256xf32>
    %178 = arith.addf %174, %177 : vector<1x256xf32>
    %179 = arith.addf %171, %178 : vector<1x256xf32>
    %180 = vector.extract_strided_slice %0 {offsets = [7, 0], sizes = [1, 256], strides = [1, 1]} : vector<8x256xf32> to vector<1x256xf32>
    %181 = vector.broadcast %6 : f32 to vector<1x256xf32>
    %182 = arith.mulf %181, %180 : vector<1x256xf32>
    %183 = vector.extract_strided_slice %1 {offsets = [7, 0], sizes = [1, 256], strides = [1, 1]} : vector<8x256xf32> to vector<1x256xf32>
    %184 = vector.broadcast %14 : f32 to vector<1x256xf32>
    %185 = arith.mulf %184, %183 : vector<1x256xf32>
    %186 = arith.addf %182, %185 : vector<1x256xf32>
    %187 = arith.addf %179, %186 : vector<1x256xf32>
    %cst_23 = arith.constant 0.000000e+00 : f32
    %188 = vector.broadcast %cst_23 : f32 to vector<1x256xf32>
    %189 = arith.maximumf %187, %188 : vector<1x256xf32>
    %190 = vector.extract_strided_slice %0 {offsets = [4, 0], sizes = [1, 256], strides = [1, 1]} : vector<8x256xf32> to vector<1x256xf32>
    %191 = vector.broadcast %7 : f32 to vector<1x256xf32>
    %192 = arith.mulf %191, %190 : vector<1x256xf32>
    %193 = vector.extract_strided_slice %1 {offsets = [4, 0], sizes = [1, 256], strides = [1, 1]} : vector<8x256xf32> to vector<1x256xf32>
    %194 = vector.broadcast %15 : f32 to vector<1x256xf32>
    %195 = arith.mulf %194, %193 : vector<1x256xf32>
    %196 = arith.addf %192, %195 : vector<1x256xf32>
    %197 = vector.extract_strided_slice %0 {offsets = [5, 0], sizes = [1, 256], strides = [1, 1]} : vector<8x256xf32> to vector<1x256xf32>
    %198 = vector.broadcast %8 : f32 to vector<1x256xf32>
    %199 = arith.mulf %198, %197 : vector<1x256xf32>
    %200 = vector.extract_strided_slice %1 {offsets = [5, 0], sizes = [1, 256], strides = [1, 1]} : vector<8x256xf32> to vector<1x256xf32>
    %201 = vector.broadcast %16 : f32 to vector<1x256xf32>
    %202 = arith.mulf %201, %200 : vector<1x256xf32>
    %203 = arith.addf %199, %202 : vector<1x256xf32>
    %204 = arith.addf %196, %203 : vector<1x256xf32>
    %205 = vector.extract_strided_slice %0 {offsets = [6, 0], sizes = [1, 256], strides = [1, 1]} : vector<8x256xf32> to vector<1x256xf32>
    %206 = vector.broadcast %9 : f32 to vector<1x256xf32>
    %207 = arith.mulf %206, %205 : vector<1x256xf32>
    %208 = vector.extract_strided_slice %1 {offsets = [6, 0], sizes = [1, 256], strides = [1, 1]} : vector<8x256xf32> to vector<1x256xf32>
    %209 = vector.broadcast %17 : f32 to vector<1x256xf32>
    %210 = arith.mulf %209, %208 : vector<1x256xf32>
    %211 = arith.addf %207, %210 : vector<1x256xf32>
    %212 = arith.addf %204, %211 : vector<1x256xf32>
    %213 = vector.extract_strided_slice %0 {offsets = [7, 0], sizes = [1, 256], strides = [1, 1]} : vector<8x256xf32> to vector<1x256xf32>
    %214 = vector.broadcast %10 : f32 to vector<1x256xf32>
    %215 = arith.mulf %214, %213 : vector<1x256xf32>
    %216 = vector.extract_strided_slice %1 {offsets = [7, 0], sizes = [1, 256], strides = [1, 1]} : vector<8x256xf32> to vector<1x256xf32>
    %217 = vector.broadcast %18 : f32 to vector<1x256xf32>
    %218 = arith.mulf %217, %216 : vector<1x256xf32>
    %219 = arith.addf %215, %218 : vector<1x256xf32>
    %220 = arith.addf %212, %219 : vector<1x256xf32>
    %cst_24 = arith.constant 0.000000e+00 : f32
    %221 = vector.broadcast %cst_24 : f32 to vector<1x256xf32>
    %222 = arith.maximumf %220, %221 : vector<1x256xf32>
    %223 = tpu.concatenate %123, %156, %189, %222 in 0 : vector<1x256xf32>, vector<1x256xf32>, vector<1x256xf32>, vector<1x256xf32> -> vector<4x256xf32>
    %c17_i32 = arith.constant 17 : i32
    %224 = tpu.dynamic_rotate %223 by %c17_i32 dim 1 : vector<4x256xf32>, i32 -> vector<4x256xf32>
    %225 = vector.extract_strided_slice %2 {offsets = [0, 0], sizes = [1, 256], strides = [1, 1]} : vector<8x256xf32> to vector<1x256xf32>
    %226 = vector.broadcast %225 : vector<1x256xf32> to vector<4x256xf32>
    %227 = arith.mulf %224, %226 : vector<4x256xf32>
    %c16_i32 = arith.constant 16 : i32
    %228 = tpu.dynamic_rotate %223 by %c16_i32 dim 1 : vector<4x256xf32>, i32 -> vector<4x256xf32>
    %229 = vector.extract_strided_slice %2 {offsets = [1, 0], sizes = [1, 256], strides = [1, 1]} : vector<8x256xf32> to vector<1x256xf32>
    %230 = vector.broadcast %229 : vector<1x256xf32> to vector<4x256xf32>
    %231 = arith.mulf %228, %230 : vector<4x256xf32>
    %c15_i32 = arith.constant 15 : i32
    %232 = tpu.dynamic_rotate %223 by %c15_i32 dim 1 : vector<4x256xf32>, i32 -> vector<4x256xf32>
    %233 = vector.extract_strided_slice %2 {offsets = [2, 0], sizes = [1, 256], strides = [1, 1]} : vector<8x256xf32> to vector<1x256xf32>
    %234 = vector.broadcast %233 : vector<1x256xf32> to vector<4x256xf32>
    %235 = arith.mulf %232, %234 : vector<4x256xf32>
    %c1_i32 = arith.constant 1 : i32
    %236 = tpu.dynamic_rotate %223 by %c1_i32 dim 1 : vector<4x256xf32>, i32 -> vector<4x256xf32>
    %237 = vector.extract_strided_slice %2 {offsets = [3, 0], sizes = [1, 256], strides = [1, 1]} : vector<8x256xf32> to vector<1x256xf32>
    %238 = vector.broadcast %237 : vector<1x256xf32> to vector<4x256xf32>
    %239 = arith.mulf %236, %238 : vector<4x256xf32>
    %c255_i32 = arith.constant 255 : i32
    %240 = tpu.dynamic_rotate %223 by %c255_i32 dim 1 : vector<4x256xf32>, i32 -> vector<4x256xf32>
    %241 = vector.extract_strided_slice %2 {offsets = [4, 0], sizes = [1, 256], strides = [1, 1]} : vector<8x256xf32> to vector<1x256xf32>
    %242 = vector.broadcast %241 : vector<1x256xf32> to vector<4x256xf32>
    %243 = arith.mulf %240, %242 : vector<4x256xf32>
    %c241_i32 = arith.constant 241 : i32
    %244 = tpu.dynamic_rotate %223 by %c241_i32 dim 1 : vector<4x256xf32>, i32 -> vector<4x256xf32>
    %245 = vector.extract_strided_slice %2 {offsets = [5, 0], sizes = [1, 256], strides = [1, 1]} : vector<8x256xf32> to vector<1x256xf32>
    %246 = vector.broadcast %245 : vector<1x256xf32> to vector<4x256xf32>
    %247 = arith.mulf %244, %246 : vector<4x256xf32>
    %c240_i32 = arith.constant 240 : i32
    %248 = tpu.dynamic_rotate %223 by %c240_i32 dim 1 : vector<4x256xf32>, i32 -> vector<4x256xf32>
    %249 = vector.extract_strided_slice %2 {offsets = [6, 0], sizes = [1, 256], strides = [1, 1]} : vector<8x256xf32> to vector<1x256xf32>
    %250 = vector.broadcast %249 : vector<1x256xf32> to vector<4x256xf32>
    %251 = arith.mulf %248, %250 : vector<4x256xf32>
    %c239_i32 = arith.constant 239 : i32
    %252 = tpu.dynamic_rotate %223 by %c239_i32 dim 1 : vector<4x256xf32>, i32 -> vector<4x256xf32>
    %253 = vector.extract_strided_slice %2 {offsets = [7, 0], sizes = [1, 256], strides = [1, 1]} : vector<8x256xf32> to vector<1x256xf32>
    %254 = vector.broadcast %253 : vector<1x256xf32> to vector<4x256xf32>
    %255 = arith.mulf %252, %254 : vector<4x256xf32>
    %256 = vector.extract_strided_slice %227 {offsets = [0, 0], sizes = [1, 256], strides = [1, 1]} : vector<4x256xf32> to vector<1x256xf32>
    %257 = vector.broadcast %19 : f32 to vector<1x256xf32>
    %258 = arith.mulf %257, %256 : vector<1x256xf32>
    %259 = vector.extract_strided_slice %227 {offsets = [1, 0], sizes = [1, 256], strides = [1, 1]} : vector<4x256xf32> to vector<1x256xf32>
    %260 = vector.broadcast %20 : f32 to vector<1x256xf32>
    %261 = arith.mulf %260, %259 : vector<1x256xf32>
    %262 = arith.addf %258, %261 : vector<1x256xf32>
    %263 = vector.extract_strided_slice %231 {offsets = [0, 0], sizes = [1, 256], strides = [1, 1]} : vector<4x256xf32> to vector<1x256xf32>
    %264 = vector.broadcast %21 : f32 to vector<1x256xf32>
    %265 = arith.mulf %264, %263 : vector<1x256xf32>
    %266 = arith.addf %262, %265 : vector<1x256xf32>
    %267 = vector.extract_strided_slice %231 {offsets = [1, 0], sizes = [1, 256], strides = [1, 1]} : vector<4x256xf32> to vector<1x256xf32>
    %268 = vector.broadcast %22 : f32 to vector<1x256xf32>
    %269 = arith.mulf %268, %267 : vector<1x256xf32>
    %270 = arith.addf %266, %269 : vector<1x256xf32>
    %271 = vector.extract_strided_slice %235 {offsets = [0, 0], sizes = [1, 256], strides = [1, 1]} : vector<4x256xf32> to vector<1x256xf32>
    %272 = vector.broadcast %23 : f32 to vector<1x256xf32>
    %273 = arith.mulf %272, %271 : vector<1x256xf32>
    %274 = arith.addf %270, %273 : vector<1x256xf32>
    %275 = vector.extract_strided_slice %235 {offsets = [1, 0], sizes = [1, 256], strides = [1, 1]} : vector<4x256xf32> to vector<1x256xf32>
    %276 = vector.broadcast %24 : f32 to vector<1x256xf32>
    %277 = arith.mulf %276, %275 : vector<1x256xf32>
    %278 = arith.addf %274, %277 : vector<1x256xf32>
    %279 = vector.extract_strided_slice %239 {offsets = [0, 0], sizes = [1, 256], strides = [1, 1]} : vector<4x256xf32> to vector<1x256xf32>
    %280 = vector.broadcast %25 : f32 to vector<1x256xf32>
    %281 = arith.mulf %280, %279 : vector<1x256xf32>
    %282 = arith.addf %278, %281 : vector<1x256xf32>
    %283 = vector.extract_strided_slice %239 {offsets = [1, 0], sizes = [1, 256], strides = [1, 1]} : vector<4x256xf32> to vector<1x256xf32>
    %284 = vector.broadcast %26 : f32 to vector<1x256xf32>
    %285 = arith.mulf %284, %283 : vector<1x256xf32>
    %286 = arith.addf %282, %285 : vector<1x256xf32>
    %287 = vector.extract_strided_slice %223 {offsets = [0, 0], sizes = [1, 256], strides = [1, 1]} : vector<4x256xf32> to vector<1x256xf32>
    %288 = vector.broadcast %27 : f32 to vector<1x256xf32>
    %289 = arith.mulf %288, %287 : vector<1x256xf32>
    %290 = arith.addf %286, %289 : vector<1x256xf32>
    %291 = vector.extract_strided_slice %223 {offsets = [1, 0], sizes = [1, 256], strides = [1, 1]} : vector<4x256xf32> to vector<1x256xf32>
    %292 = vector.broadcast %28 : f32 to vector<1x256xf32>
    %293 = arith.mulf %292, %291 : vector<1x256xf32>
    %294 = arith.addf %290, %293 : vector<1x256xf32>
    %295 = vector.extract_strided_slice %243 {offsets = [0, 0], sizes = [1, 256], strides = [1, 1]} : vector<4x256xf32> to vector<1x256xf32>
    %296 = vector.broadcast %29 : f32 to vector<1x256xf32>
    %297 = arith.mulf %296, %295 : vector<1x256xf32>
    %298 = arith.addf %294, %297 : vector<1x256xf32>
    %299 = vector.extract_strided_slice %243 {offsets = [1, 0], sizes = [1, 256], strides = [1, 1]} : vector<4x256xf32> to vector<1x256xf32>
    %300 = vector.broadcast %30 : f32 to vector<1x256xf32>
    %301 = arith.mulf %300, %299 : vector<1x256xf32>
    %302 = arith.addf %298, %301 : vector<1x256xf32>
    %303 = vector.extract_strided_slice %247 {offsets = [0, 0], sizes = [1, 256], strides = [1, 1]} : vector<4x256xf32> to vector<1x256xf32>
    %304 = vector.broadcast %31 : f32 to vector<1x256xf32>
    %305 = arith.mulf %304, %303 : vector<1x256xf32>
    %306 = arith.addf %302, %305 : vector<1x256xf32>
    %307 = vector.extract_strided_slice %247 {offsets = [1, 0], sizes = [1, 256], strides = [1, 1]} : vector<4x256xf32> to vector<1x256xf32>
    %308 = vector.broadcast %32 : f32 to vector<1x256xf32>
    %309 = arith.mulf %308, %307 : vector<1x256xf32>
    %310 = arith.addf %306, %309 : vector<1x256xf32>
    %311 = vector.extract_strided_slice %251 {offsets = [0, 0], sizes = [1, 256], strides = [1, 1]} : vector<4x256xf32> to vector<1x256xf32>
    %312 = vector.broadcast %33 : f32 to vector<1x256xf32>
    %313 = arith.mulf %312, %311 : vector<1x256xf32>
    %314 = arith.addf %310, %313 : vector<1x256xf32>
    %315 = vector.extract_strided_slice %251 {offsets = [1, 0], sizes = [1, 256], strides = [1, 1]} : vector<4x256xf32> to vector<1x256xf32>
    %316 = vector.broadcast %34 : f32 to vector<1x256xf32>
    %317 = arith.mulf %316, %315 : vector<1x256xf32>
    %318 = arith.addf %314, %317 : vector<1x256xf32>
    %319 = vector.extract_strided_slice %255 {offsets = [0, 0], sizes = [1, 256], strides = [1, 1]} : vector<4x256xf32> to vector<1x256xf32>
    %320 = vector.broadcast %35 : f32 to vector<1x256xf32>
    %321 = arith.mulf %320, %319 : vector<1x256xf32>
    %322 = arith.addf %318, %321 : vector<1x256xf32>
    %323 = vector.extract_strided_slice %255 {offsets = [1, 0], sizes = [1, 256], strides = [1, 1]} : vector<4x256xf32> to vector<1x256xf32>
    %324 = vector.broadcast %36 : f32 to vector<1x256xf32>
    %325 = arith.mulf %324, %323 : vector<1x256xf32>
    %326 = arith.addf %322, %325 : vector<1x256xf32>
    %327 = vector.extract_strided_slice %227 {offsets = [0, 0], sizes = [1, 256], strides = [1, 1]} : vector<4x256xf32> to vector<1x256xf32>
    %328 = vector.broadcast %37 : f32 to vector<1x256xf32>
    %329 = arith.mulf %328, %327 : vector<1x256xf32>
    %330 = vector.extract_strided_slice %227 {offsets = [1, 0], sizes = [1, 256], strides = [1, 1]} : vector<4x256xf32> to vector<1x256xf32>
    %331 = vector.broadcast %38 : f32 to vector<1x256xf32>
    %332 = arith.mulf %331, %330 : vector<1x256xf32>
    %333 = arith.addf %329, %332 : vector<1x256xf32>
    %334 = vector.extract_strided_slice %231 {offsets = [0, 0], sizes = [1, 256], strides = [1, 1]} : vector<4x256xf32> to vector<1x256xf32>
    %335 = vector.broadcast %39 : f32 to vector<1x256xf32>
    %336 = arith.mulf %335, %334 : vector<1x256xf32>
    %337 = arith.addf %333, %336 : vector<1x256xf32>
    %338 = vector.extract_strided_slice %231 {offsets = [1, 0], sizes = [1, 256], strides = [1, 1]} : vector<4x256xf32> to vector<1x256xf32>
    %339 = vector.broadcast %40 : f32 to vector<1x256xf32>
    %340 = arith.mulf %339, %338 : vector<1x256xf32>
    %341 = arith.addf %337, %340 : vector<1x256xf32>
    %342 = vector.extract_strided_slice %235 {offsets = [0, 0], sizes = [1, 256], strides = [1, 1]} : vector<4x256xf32> to vector<1x256xf32>
    %343 = vector.broadcast %41 : f32 to vector<1x256xf32>
    %344 = arith.mulf %343, %342 : vector<1x256xf32>
    %345 = arith.addf %341, %344 : vector<1x256xf32>
    %346 = vector.extract_strided_slice %235 {offsets = [1, 0], sizes = [1, 256], strides = [1, 1]} : vector<4x256xf32> to vector<1x256xf32>
    %347 = vector.broadcast %42 : f32 to vector<1x256xf32>
    %348 = arith.mulf %347, %346 : vector<1x256xf32>
    %349 = arith.addf %345, %348 : vector<1x256xf32>
    %350 = vector.extract_strided_slice %239 {offsets = [0, 0], sizes = [1, 256], strides = [1, 1]} : vector<4x256xf32> to vector<1x256xf32>
    %351 = vector.broadcast %43 : f32 to vector<1x256xf32>
    %352 = arith.mulf %351, %350 : vector<1x256xf32>
    %353 = arith.addf %349, %352 : vector<1x256xf32>
    %354 = vector.extract_strided_slice %239 {offsets = [1, 0], sizes = [1, 256], strides = [1, 1]} : vector<4x256xf32> to vector<1x256xf32>
    %355 = vector.broadcast %44 : f32 to vector<1x256xf32>
    %356 = arith.mulf %355, %354 : vector<1x256xf32>
    %357 = arith.addf %353, %356 : vector<1x256xf32>
    %358 = vector.extract_strided_slice %223 {offsets = [0, 0], sizes = [1, 256], strides = [1, 1]} : vector<4x256xf32> to vector<1x256xf32>
    %359 = vector.broadcast %45 : f32 to vector<1x256xf32>
    %360 = arith.mulf %359, %358 : vector<1x256xf32>
    %361 = arith.addf %357, %360 : vector<1x256xf32>
    %362 = vector.extract_strided_slice %223 {offsets = [1, 0], sizes = [1, 256], strides = [1, 1]} : vector<4x256xf32> to vector<1x256xf32>
    %363 = vector.broadcast %46 : f32 to vector<1x256xf32>
    %364 = arith.mulf %363, %362 : vector<1x256xf32>
    %365 = arith.addf %361, %364 : vector<1x256xf32>
    %366 = vector.extract_strided_slice %243 {offsets = [0, 0], sizes = [1, 256], strides = [1, 1]} : vector<4x256xf32> to vector<1x256xf32>
    %367 = vector.broadcast %47 : f32 to vector<1x256xf32>
    %368 = arith.mulf %367, %366 : vector<1x256xf32>
    %369 = arith.addf %365, %368 : vector<1x256xf32>
    %370 = vector.extract_strided_slice %243 {offsets = [1, 0], sizes = [1, 256], strides = [1, 1]} : vector<4x256xf32> to vector<1x256xf32>
    %371 = vector.broadcast %48 : f32 to vector<1x256xf32>
    %372 = arith.mulf %371, %370 : vector<1x256xf32>
    %373 = arith.addf %369, %372 : vector<1x256xf32>
    %374 = vector.extract_strided_slice %247 {offsets = [0, 0], sizes = [1, 256], strides = [1, 1]} : vector<4x256xf32> to vector<1x256xf32>
    %375 = vector.broadcast %49 : f32 to vector<1x256xf32>
    %376 = arith.mulf %375, %374 : vector<1x256xf32>
    %377 = arith.addf %373, %376 : vector<1x256xf32>
    %378 = vector.extract_strided_slice %247 {offsets = [1, 0], sizes = [1, 256], strides = [1, 1]} : vector<4x256xf32> to vector<1x256xf32>
    %379 = vector.broadcast %50 : f32 to vector<1x256xf32>
    %380 = arith.mulf %379, %378 : vector<1x256xf32>
    %381 = arith.addf %377, %380 : vector<1x256xf32>
    %382 = vector.extract_strided_slice %251 {offsets = [0, 0], sizes = [1, 256], strides = [1, 1]} : vector<4x256xf32> to vector<1x256xf32>
    %383 = vector.broadcast %51 : f32 to vector<1x256xf32>
    %384 = arith.mulf %383, %382 : vector<1x256xf32>
    %385 = arith.addf %381, %384 : vector<1x256xf32>
    %386 = vector.extract_strided_slice %251 {offsets = [1, 0], sizes = [1, 256], strides = [1, 1]} : vector<4x256xf32> to vector<1x256xf32>
    %387 = vector.broadcast %52 : f32 to vector<1x256xf32>
    %388 = arith.mulf %387, %386 : vector<1x256xf32>
    %389 = arith.addf %385, %388 : vector<1x256xf32>
    %390 = vector.extract_strided_slice %255 {offsets = [0, 0], sizes = [1, 256], strides = [1, 1]} : vector<4x256xf32> to vector<1x256xf32>
    %391 = vector.broadcast %53 : f32 to vector<1x256xf32>
    %392 = arith.mulf %391, %390 : vector<1x256xf32>
    %393 = arith.addf %389, %392 : vector<1x256xf32>
    %394 = vector.extract_strided_slice %255 {offsets = [1, 0], sizes = [1, 256], strides = [1, 1]} : vector<4x256xf32> to vector<1x256xf32>
    %395 = vector.broadcast %54 : f32 to vector<1x256xf32>
    %396 = arith.mulf %395, %394 : vector<1x256xf32>
    %397 = arith.addf %393, %396 : vector<1x256xf32>
    %398 = vector.extract_strided_slice %227 {offsets = [0, 0], sizes = [1, 256], strides = [1, 1]} : vector<4x256xf32> to vector<1x256xf32>
    %399 = vector.broadcast %55 : f32 to vector<1x256xf32>
    %400 = arith.mulf %399, %398 : vector<1x256xf32>
    %401 = vector.extract_strided_slice %227 {offsets = [1, 0], sizes = [1, 256], strides = [1, 1]} : vector<4x256xf32> to vector<1x256xf32>
    %402 = vector.broadcast %56 : f32 to vector<1x256xf32>
    %403 = arith.mulf %402, %401 : vector<1x256xf32>
    %404 = arith.addf %400, %403 : vector<1x256xf32>
    %405 = vector.extract_strided_slice %231 {offsets = [0, 0], sizes = [1, 256], strides = [1, 1]} : vector<4x256xf32> to vector<1x256xf32>
    %406 = vector.broadcast %57 : f32 to vector<1x256xf32>
    %407 = arith.mulf %406, %405 : vector<1x256xf32>
    %408 = arith.addf %404, %407 : vector<1x256xf32>
    %409 = vector.extract_strided_slice %231 {offsets = [1, 0], sizes = [1, 256], strides = [1, 1]} : vector<4x256xf32> to vector<1x256xf32>
    %410 = vector.broadcast %58 : f32 to vector<1x256xf32>
    %411 = arith.mulf %410, %409 : vector<1x256xf32>
    %412 = arith.addf %408, %411 : vector<1x256xf32>
    %413 = vector.extract_strided_slice %235 {offsets = [0, 0], sizes = [1, 256], strides = [1, 1]} : vector<4x256xf32> to vector<1x256xf32>
    %414 = vector.broadcast %59 : f32 to vector<1x256xf32>
    %415 = arith.mulf %414, %413 : vector<1x256xf32>
    %416 = arith.addf %412, %415 : vector<1x256xf32>
    %417 = vector.extract_strided_slice %235 {offsets = [1, 0], sizes = [1, 256], strides = [1, 1]} : vector<4x256xf32> to vector<1x256xf32>
    %418 = vector.broadcast %60 : f32 to vector<1x256xf32>
    %419 = arith.mulf %418, %417 : vector<1x256xf32>
    %420 = arith.addf %416, %419 : vector<1x256xf32>
    %421 = vector.extract_strided_slice %239 {offsets = [0, 0], sizes = [1, 256], strides = [1, 1]} : vector<4x256xf32> to vector<1x256xf32>
    %422 = vector.broadcast %61 : f32 to vector<1x256xf32>
    %423 = arith.mulf %422, %421 : vector<1x256xf32>
    %424 = arith.addf %420, %423 : vector<1x256xf32>
    %425 = vector.extract_strided_slice %239 {offsets = [1, 0], sizes = [1, 256], strides = [1, 1]} : vector<4x256xf32> to vector<1x256xf32>
    %426 = vector.broadcast %62 : f32 to vector<1x256xf32>
    %427 = arith.mulf %426, %425 : vector<1x256xf32>
    %428 = arith.addf %424, %427 : vector<1x256xf32>
    %429 = vector.extract_strided_slice %223 {offsets = [0, 0], sizes = [1, 256], strides = [1, 1]} : vector<4x256xf32> to vector<1x256xf32>
    %430 = vector.broadcast %63 : f32 to vector<1x256xf32>
    %431 = arith.mulf %430, %429 : vector<1x256xf32>
    %432 = arith.addf %428, %431 : vector<1x256xf32>
    %433 = vector.extract_strided_slice %223 {offsets = [1, 0], sizes = [1, 256], strides = [1, 1]} : vector<4x256xf32> to vector<1x256xf32>
    %434 = vector.broadcast %64 : f32 to vector<1x256xf32>
    %435 = arith.mulf %434, %433 : vector<1x256xf32>
    %436 = arith.addf %432, %435 : vector<1x256xf32>
    %437 = vector.extract_strided_slice %243 {offsets = [0, 0], sizes = [1, 256], strides = [1, 1]} : vector<4x256xf32> to vector<1x256xf32>
    %438 = vector.broadcast %65 : f32 to vector<1x256xf32>
    %439 = arith.mulf %438, %437 : vector<1x256xf32>
    %440 = arith.addf %436, %439 : vector<1x256xf32>
    %441 = vector.extract_strided_slice %243 {offsets = [1, 0], sizes = [1, 256], strides = [1, 1]} : vector<4x256xf32> to vector<1x256xf32>
    %442 = vector.broadcast %66 : f32 to vector<1x256xf32>
    %443 = arith.mulf %442, %441 : vector<1x256xf32>
    %444 = arith.addf %440, %443 : vector<1x256xf32>
    %445 = vector.extract_strided_slice %247 {offsets = [0, 0], sizes = [1, 256], strides = [1, 1]} : vector<4x256xf32> to vector<1x256xf32>
    %446 = vector.broadcast %67 : f32 to vector<1x256xf32>
    %447 = arith.mulf %446, %445 : vector<1x256xf32>
    %448 = arith.addf %444, %447 : vector<1x256xf32>
    %449 = vector.extract_strided_slice %247 {offsets = [1, 0], sizes = [1, 256], strides = [1, 1]} : vector<4x256xf32> to vector<1x256xf32>
    %450 = vector.broadcast %68 : f32 to vector<1x256xf32>
    %451 = arith.mulf %450, %449 : vector<1x256xf32>
    %452 = arith.addf %448, %451 : vector<1x256xf32>
    %453 = vector.extract_strided_slice %251 {offsets = [0, 0], sizes = [1, 256], strides = [1, 1]} : vector<4x256xf32> to vector<1x256xf32>
    %454 = vector.broadcast %69 : f32 to vector<1x256xf32>
    %455 = arith.mulf %454, %453 : vector<1x256xf32>
    %456 = arith.addf %452, %455 : vector<1x256xf32>
    %457 = vector.extract_strided_slice %251 {offsets = [1, 0], sizes = [1, 256], strides = [1, 1]} : vector<4x256xf32> to vector<1x256xf32>
    %458 = vector.broadcast %70 : f32 to vector<1x256xf32>
    %459 = arith.mulf %458, %457 : vector<1x256xf32>
    %460 = arith.addf %456, %459 : vector<1x256xf32>
    %461 = vector.extract_strided_slice %255 {offsets = [0, 0], sizes = [1, 256], strides = [1, 1]} : vector<4x256xf32> to vector<1x256xf32>
    %462 = vector.broadcast %71 : f32 to vector<1x256xf32>
    %463 = arith.mulf %462, %461 : vector<1x256xf32>
    %464 = arith.addf %460, %463 : vector<1x256xf32>
    %465 = vector.extract_strided_slice %255 {offsets = [1, 0], sizes = [1, 256], strides = [1, 1]} : vector<4x256xf32> to vector<1x256xf32>
    %466 = vector.broadcast %72 : f32 to vector<1x256xf32>
    %467 = arith.mulf %466, %465 : vector<1x256xf32>
    %468 = arith.addf %464, %467 : vector<1x256xf32>
    %469 = vector.extract_strided_slice %227 {offsets = [0, 0], sizes = [1, 256], strides = [1, 1]} : vector<4x256xf32> to vector<1x256xf32>
    %470 = vector.broadcast %73 : f32 to vector<1x256xf32>
    %471 = arith.mulf %470, %469 : vector<1x256xf32>
    %472 = vector.extract_strided_slice %227 {offsets = [1, 0], sizes = [1, 256], strides = [1, 1]} : vector<4x256xf32> to vector<1x256xf32>
    %473 = vector.broadcast %74 : f32 to vector<1x256xf32>
    %474 = arith.mulf %473, %472 : vector<1x256xf32>
    %475 = arith.addf %471, %474 : vector<1x256xf32>
    %476 = vector.extract_strided_slice %231 {offsets = [0, 0], sizes = [1, 256], strides = [1, 1]} : vector<4x256xf32> to vector<1x256xf32>
    %477 = vector.broadcast %75 : f32 to vector<1x256xf32>
    %478 = arith.mulf %477, %476 : vector<1x256xf32>
    %479 = arith.addf %475, %478 : vector<1x256xf32>
    %480 = vector.extract_strided_slice %231 {offsets = [1, 0], sizes = [1, 256], strides = [1, 1]} : vector<4x256xf32> to vector<1x256xf32>
    %481 = vector.broadcast %76 : f32 to vector<1x256xf32>
    %482 = arith.mulf %481, %480 : vector<1x256xf32>
    %483 = arith.addf %479, %482 : vector<1x256xf32>
    %484 = vector.extract_strided_slice %235 {offsets = [0, 0], sizes = [1, 256], strides = [1, 1]} : vector<4x256xf32> to vector<1x256xf32>
    %485 = vector.broadcast %77 : f32 to vector<1x256xf32>
    %486 = arith.mulf %485, %484 : vector<1x256xf32>
    %487 = arith.addf %483, %486 : vector<1x256xf32>
    %488 = vector.extract_strided_slice %235 {offsets = [1, 0], sizes = [1, 256], strides = [1, 1]} : vector<4x256xf32> to vector<1x256xf32>
    %489 = vector.broadcast %78 : f32 to vector<1x256xf32>
    %490 = arith.mulf %489, %488 : vector<1x256xf32>
    %491 = arith.addf %487, %490 : vector<1x256xf32>
    %492 = vector.extract_strided_slice %239 {offsets = [0, 0], sizes = [1, 256], strides = [1, 1]} : vector<4x256xf32> to vector<1x256xf32>
    %493 = vector.broadcast %79 : f32 to vector<1x256xf32>
    %494 = arith.mulf %493, %492 : vector<1x256xf32>
    %495 = arith.addf %491, %494 : vector<1x256xf32>
    %496 = vector.extract_strided_slice %239 {offsets = [1, 0], sizes = [1, 256], strides = [1, 1]} : vector<4x256xf32> to vector<1x256xf32>
    %497 = vector.broadcast %80 : f32 to vector<1x256xf32>
    %498 = arith.mulf %497, %496 : vector<1x256xf32>
    %499 = arith.addf %495, %498 : vector<1x256xf32>
    %500 = vector.extract_strided_slice %223 {offsets = [0, 0], sizes = [1, 256], strides = [1, 1]} : vector<4x256xf32> to vector<1x256xf32>
    %501 = vector.broadcast %81 : f32 to vector<1x256xf32>
    %502 = arith.mulf %501, %500 : vector<1x256xf32>
    %503 = arith.addf %499, %502 : vector<1x256xf32>
    %504 = vector.extract_strided_slice %223 {offsets = [1, 0], sizes = [1, 256], strides = [1, 1]} : vector<4x256xf32> to vector<1x256xf32>
    %505 = vector.broadcast %82 : f32 to vector<1x256xf32>
    %506 = arith.mulf %505, %504 : vector<1x256xf32>
    %507 = arith.addf %503, %506 : vector<1x256xf32>
    %508 = vector.extract_strided_slice %243 {offsets = [0, 0], sizes = [1, 256], strides = [1, 1]} : vector<4x256xf32> to vector<1x256xf32>
    %509 = vector.broadcast %83 : f32 to vector<1x256xf32>
    %510 = arith.mulf %509, %508 : vector<1x256xf32>
    %511 = arith.addf %507, %510 : vector<1x256xf32>
    %512 = vector.extract_strided_slice %243 {offsets = [1, 0], sizes = [1, 256], strides = [1, 1]} : vector<4x256xf32> to vector<1x256xf32>
    %513 = vector.broadcast %84 : f32 to vector<1x256xf32>
    %514 = arith.mulf %513, %512 : vector<1x256xf32>
    %515 = arith.addf %511, %514 : vector<1x256xf32>
    %516 = vector.extract_strided_slice %247 {offsets = [0, 0], sizes = [1, 256], strides = [1, 1]} : vector<4x256xf32> to vector<1x256xf32>
    %517 = vector.broadcast %85 : f32 to vector<1x256xf32>
    %518 = arith.mulf %517, %516 : vector<1x256xf32>
    %519 = arith.addf %515, %518 : vector<1x256xf32>
    %520 = vector.extract_strided_slice %247 {offsets = [1, 0], sizes = [1, 256], strides = [1, 1]} : vector<4x256xf32> to vector<1x256xf32>
    %521 = vector.broadcast %86 : f32 to vector<1x256xf32>
    %522 = arith.mulf %521, %520 : vector<1x256xf32>
    %523 = arith.addf %519, %522 : vector<1x256xf32>
    %524 = vector.extract_strided_slice %251 {offsets = [0, 0], sizes = [1, 256], strides = [1, 1]} : vector<4x256xf32> to vector<1x256xf32>
    %525 = vector.broadcast %87 : f32 to vector<1x256xf32>
    %526 = arith.mulf %525, %524 : vector<1x256xf32>
    %527 = arith.addf %523, %526 : vector<1x256xf32>
    %528 = vector.extract_strided_slice %251 {offsets = [1, 0], sizes = [1, 256], strides = [1, 1]} : vector<4x256xf32> to vector<1x256xf32>
    %529 = vector.broadcast %88 : f32 to vector<1x256xf32>
    %530 = arith.mulf %529, %528 : vector<1x256xf32>
    %531 = arith.addf %527, %530 : vector<1x256xf32>
    %532 = vector.extract_strided_slice %255 {offsets = [0, 0], sizes = [1, 256], strides = [1, 1]} : vector<4x256xf32> to vector<1x256xf32>
    %533 = vector.broadcast %89 : f32 to vector<1x256xf32>
    %534 = arith.mulf %533, %532 : vector<1x256xf32>
    %535 = arith.addf %531, %534 : vector<1x256xf32>
    %536 = vector.extract_strided_slice %255 {offsets = [1, 0], sizes = [1, 256], strides = [1, 1]} : vector<4x256xf32> to vector<1x256xf32>
    %537 = vector.broadcast %90 : f32 to vector<1x256xf32>
    %538 = arith.mulf %537, %536 : vector<1x256xf32>
    %539 = arith.addf %535, %538 : vector<1x256xf32>
    %540 = vector.extract_strided_slice %227 {offsets = [2, 0], sizes = [1, 256], strides = [1, 1]} : vector<4x256xf32> to vector<1x256xf32>
    %541 = vector.broadcast %19 : f32 to vector<1x256xf32>
    %542 = arith.mulf %541, %540 : vector<1x256xf32>
    %543 = vector.extract_strided_slice %227 {offsets = [3, 0], sizes = [1, 256], strides = [1, 1]} : vector<4x256xf32> to vector<1x256xf32>
    %544 = vector.broadcast %20 : f32 to vector<1x256xf32>
    %545 = arith.mulf %544, %543 : vector<1x256xf32>
    %546 = arith.addf %542, %545 : vector<1x256xf32>
    %547 = vector.extract_strided_slice %231 {offsets = [2, 0], sizes = [1, 256], strides = [1, 1]} : vector<4x256xf32> to vector<1x256xf32>
    %548 = vector.broadcast %21 : f32 to vector<1x256xf32>
    %549 = arith.mulf %548, %547 : vector<1x256xf32>
    %550 = arith.addf %546, %549 : vector<1x256xf32>
    %551 = vector.extract_strided_slice %231 {offsets = [3, 0], sizes = [1, 256], strides = [1, 1]} : vector<4x256xf32> to vector<1x256xf32>
    %552 = vector.broadcast %22 : f32 to vector<1x256xf32>
    %553 = arith.mulf %552, %551 : vector<1x256xf32>
    %554 = arith.addf %550, %553 : vector<1x256xf32>
    %555 = vector.extract_strided_slice %235 {offsets = [2, 0], sizes = [1, 256], strides = [1, 1]} : vector<4x256xf32> to vector<1x256xf32>
    %556 = vector.broadcast %23 : f32 to vector<1x256xf32>
    %557 = arith.mulf %556, %555 : vector<1x256xf32>
    %558 = arith.addf %554, %557 : vector<1x256xf32>
    %559 = vector.extract_strided_slice %235 {offsets = [3, 0], sizes = [1, 256], strides = [1, 1]} : vector<4x256xf32> to vector<1x256xf32>
    %560 = vector.broadcast %24 : f32 to vector<1x256xf32>
    %561 = arith.mulf %560, %559 : vector<1x256xf32>
    %562 = arith.addf %558, %561 : vector<1x256xf32>
    %563 = vector.extract_strided_slice %239 {offsets = [2, 0], sizes = [1, 256], strides = [1, 1]} : vector<4x256xf32> to vector<1x256xf32>
    %564 = vector.broadcast %25 : f32 to vector<1x256xf32>
    %565 = arith.mulf %564, %563 : vector<1x256xf32>
    %566 = arith.addf %562, %565 : vector<1x256xf32>
    %567 = vector.extract_strided_slice %239 {offsets = [3, 0], sizes = [1, 256], strides = [1, 1]} : vector<4x256xf32> to vector<1x256xf32>
    %568 = vector.broadcast %26 : f32 to vector<1x256xf32>
    %569 = arith.mulf %568, %567 : vector<1x256xf32>
    %570 = arith.addf %566, %569 : vector<1x256xf32>
    %571 = vector.extract_strided_slice %223 {offsets = [2, 0], sizes = [1, 256], strides = [1, 1]} : vector<4x256xf32> to vector<1x256xf32>
    %572 = vector.broadcast %27 : f32 to vector<1x256xf32>
    %573 = arith.mulf %572, %571 : vector<1x256xf32>
    %574 = arith.addf %570, %573 : vector<1x256xf32>
    %575 = vector.extract_strided_slice %223 {offsets = [3, 0], sizes = [1, 256], strides = [1, 1]} : vector<4x256xf32> to vector<1x256xf32>
    %576 = vector.broadcast %28 : f32 to vector<1x256xf32>
    %577 = arith.mulf %576, %575 : vector<1x256xf32>
    %578 = arith.addf %574, %577 : vector<1x256xf32>
    %579 = vector.extract_strided_slice %243 {offsets = [2, 0], sizes = [1, 256], strides = [1, 1]} : vector<4x256xf32> to vector<1x256xf32>
    %580 = vector.broadcast %29 : f32 to vector<1x256xf32>
    %581 = arith.mulf %580, %579 : vector<1x256xf32>
    %582 = arith.addf %578, %581 : vector<1x256xf32>
    %583 = vector.extract_strided_slice %243 {offsets = [3, 0], sizes = [1, 256], strides = [1, 1]} : vector<4x256xf32> to vector<1x256xf32>
    %584 = vector.broadcast %30 : f32 to vector<1x256xf32>
    %585 = arith.mulf %584, %583 : vector<1x256xf32>
    %586 = arith.addf %582, %585 : vector<1x256xf32>
    %587 = vector.extract_strided_slice %247 {offsets = [2, 0], sizes = [1, 256], strides = [1, 1]} : vector<4x256xf32> to vector<1x256xf32>
    %588 = vector.broadcast %31 : f32 to vector<1x256xf32>
    %589 = arith.mulf %588, %587 : vector<1x256xf32>
    %590 = arith.addf %586, %589 : vector<1x256xf32>
    %591 = vector.extract_strided_slice %247 {offsets = [3, 0], sizes = [1, 256], strides = [1, 1]} : vector<4x256xf32> to vector<1x256xf32>
    %592 = vector.broadcast %32 : f32 to vector<1x256xf32>
    %593 = arith.mulf %592, %591 : vector<1x256xf32>
    %594 = arith.addf %590, %593 : vector<1x256xf32>
    %595 = vector.extract_strided_slice %251 {offsets = [2, 0], sizes = [1, 256], strides = [1, 1]} : vector<4x256xf32> to vector<1x256xf32>
    %596 = vector.broadcast %33 : f32 to vector<1x256xf32>
    %597 = arith.mulf %596, %595 : vector<1x256xf32>
    %598 = arith.addf %594, %597 : vector<1x256xf32>
    %599 = vector.extract_strided_slice %251 {offsets = [3, 0], sizes = [1, 256], strides = [1, 1]} : vector<4x256xf32> to vector<1x256xf32>
    %600 = vector.broadcast %34 : f32 to vector<1x256xf32>
    %601 = arith.mulf %600, %599 : vector<1x256xf32>
    %602 = arith.addf %598, %601 : vector<1x256xf32>
    %603 = vector.extract_strided_slice %255 {offsets = [2, 0], sizes = [1, 256], strides = [1, 1]} : vector<4x256xf32> to vector<1x256xf32>
    %604 = vector.broadcast %35 : f32 to vector<1x256xf32>
    %605 = arith.mulf %604, %603 : vector<1x256xf32>
    %606 = arith.addf %602, %605 : vector<1x256xf32>
    %607 = vector.extract_strided_slice %255 {offsets = [3, 0], sizes = [1, 256], strides = [1, 1]} : vector<4x256xf32> to vector<1x256xf32>
    %608 = vector.broadcast %36 : f32 to vector<1x256xf32>
    %609 = arith.mulf %608, %607 : vector<1x256xf32>
    %610 = arith.addf %606, %609 : vector<1x256xf32>
    %611 = vector.extract_strided_slice %227 {offsets = [2, 0], sizes = [1, 256], strides = [1, 1]} : vector<4x256xf32> to vector<1x256xf32>
    %612 = vector.broadcast %37 : f32 to vector<1x256xf32>
    %613 = arith.mulf %612, %611 : vector<1x256xf32>
    %614 = vector.extract_strided_slice %227 {offsets = [3, 0], sizes = [1, 256], strides = [1, 1]} : vector<4x256xf32> to vector<1x256xf32>
    %615 = vector.broadcast %38 : f32 to vector<1x256xf32>
    %616 = arith.mulf %615, %614 : vector<1x256xf32>
    %617 = arith.addf %613, %616 : vector<1x256xf32>
    %618 = vector.extract_strided_slice %231 {offsets = [2, 0], sizes = [1, 256], strides = [1, 1]} : vector<4x256xf32> to vector<1x256xf32>
    %619 = vector.broadcast %39 : f32 to vector<1x256xf32>
    %620 = arith.mulf %619, %618 : vector<1x256xf32>
    %621 = arith.addf %617, %620 : vector<1x256xf32>
    %622 = vector.extract_strided_slice %231 {offsets = [3, 0], sizes = [1, 256], strides = [1, 1]} : vector<4x256xf32> to vector<1x256xf32>
    %623 = vector.broadcast %40 : f32 to vector<1x256xf32>
    %624 = arith.mulf %623, %622 : vector<1x256xf32>
    %625 = arith.addf %621, %624 : vector<1x256xf32>
    %626 = vector.extract_strided_slice %235 {offsets = [2, 0], sizes = [1, 256], strides = [1, 1]} : vector<4x256xf32> to vector<1x256xf32>
    %627 = vector.broadcast %41 : f32 to vector<1x256xf32>
    %628 = arith.mulf %627, %626 : vector<1x256xf32>
    %629 = arith.addf %625, %628 : vector<1x256xf32>
    %630 = vector.extract_strided_slice %235 {offsets = [3, 0], sizes = [1, 256], strides = [1, 1]} : vector<4x256xf32> to vector<1x256xf32>
    %631 = vector.broadcast %42 : f32 to vector<1x256xf32>
    %632 = arith.mulf %631, %630 : vector<1x256xf32>
    %633 = arith.addf %629, %632 : vector<1x256xf32>
    %634 = vector.extract_strided_slice %239 {offsets = [2, 0], sizes = [1, 256], strides = [1, 1]} : vector<4x256xf32> to vector<1x256xf32>
    %635 = vector.broadcast %43 : f32 to vector<1x256xf32>
    %636 = arith.mulf %635, %634 : vector<1x256xf32>
    %637 = arith.addf %633, %636 : vector<1x256xf32>
    %638 = vector.extract_strided_slice %239 {offsets = [3, 0], sizes = [1, 256], strides = [1, 1]} : vector<4x256xf32> to vector<1x256xf32>
    %639 = vector.broadcast %44 : f32 to vector<1x256xf32>
    %640 = arith.mulf %639, %638 : vector<1x256xf32>
    %641 = arith.addf %637, %640 : vector<1x256xf32>
    %642 = vector.extract_strided_slice %223 {offsets = [2, 0], sizes = [1, 256], strides = [1, 1]} : vector<4x256xf32> to vector<1x256xf32>
    %643 = vector.broadcast %45 : f32 to vector<1x256xf32>
    %644 = arith.mulf %643, %642 : vector<1x256xf32>
    %645 = arith.addf %641, %644 : vector<1x256xf32>
    %646 = vector.extract_strided_slice %223 {offsets = [3, 0], sizes = [1, 256], strides = [1, 1]} : vector<4x256xf32> to vector<1x256xf32>
    %647 = vector.broadcast %46 : f32 to vector<1x256xf32>
    %648 = arith.mulf %647, %646 : vector<1x256xf32>
    %649 = arith.addf %645, %648 : vector<1x256xf32>
    %650 = vector.extract_strided_slice %243 {offsets = [2, 0], sizes = [1, 256], strides = [1, 1]} : vector<4x256xf32> to vector<1x256xf32>
    %651 = vector.broadcast %47 : f32 to vector<1x256xf32>
    %652 = arith.mulf %651, %650 : vector<1x256xf32>
    %653 = arith.addf %649, %652 : vector<1x256xf32>
    %654 = vector.extract_strided_slice %243 {offsets = [3, 0], sizes = [1, 256], strides = [1, 1]} : vector<4x256xf32> to vector<1x256xf32>
    %655 = vector.broadcast %48 : f32 to vector<1x256xf32>
    %656 = arith.mulf %655, %654 : vector<1x256xf32>
    %657 = arith.addf %653, %656 : vector<1x256xf32>
    %658 = vector.extract_strided_slice %247 {offsets = [2, 0], sizes = [1, 256], strides = [1, 1]} : vector<4x256xf32> to vector<1x256xf32>
    %659 = vector.broadcast %49 : f32 to vector<1x256xf32>
    %660 = arith.mulf %659, %658 : vector<1x256xf32>
    %661 = arith.addf %657, %660 : vector<1x256xf32>
    %662 = vector.extract_strided_slice %247 {offsets = [3, 0], sizes = [1, 256], strides = [1, 1]} : vector<4x256xf32> to vector<1x256xf32>
    %663 = vector.broadcast %50 : f32 to vector<1x256xf32>
    %664 = arith.mulf %663, %662 : vector<1x256xf32>
    %665 = arith.addf %661, %664 : vector<1x256xf32>
    %666 = vector.extract_strided_slice %251 {offsets = [2, 0], sizes = [1, 256], strides = [1, 1]} : vector<4x256xf32> to vector<1x256xf32>
    %667 = vector.broadcast %51 : f32 to vector<1x256xf32>
    %668 = arith.mulf %667, %666 : vector<1x256xf32>
    %669 = arith.addf %665, %668 : vector<1x256xf32>
    %670 = vector.extract_strided_slice %251 {offsets = [3, 0], sizes = [1, 256], strides = [1, 1]} : vector<4x256xf32> to vector<1x256xf32>
    %671 = vector.broadcast %52 : f32 to vector<1x256xf32>
    %672 = arith.mulf %671, %670 : vector<1x256xf32>
    %673 = arith.addf %669, %672 : vector<1x256xf32>
    %674 = vector.extract_strided_slice %255 {offsets = [2, 0], sizes = [1, 256], strides = [1, 1]} : vector<4x256xf32> to vector<1x256xf32>
    %675 = vector.broadcast %53 : f32 to vector<1x256xf32>
    %676 = arith.mulf %675, %674 : vector<1x256xf32>
    %677 = arith.addf %673, %676 : vector<1x256xf32>
    %678 = vector.extract_strided_slice %255 {offsets = [3, 0], sizes = [1, 256], strides = [1, 1]} : vector<4x256xf32> to vector<1x256xf32>
    %679 = vector.broadcast %54 : f32 to vector<1x256xf32>
    %680 = arith.mulf %679, %678 : vector<1x256xf32>
    %681 = arith.addf %677, %680 : vector<1x256xf32>
    %682 = vector.extract_strided_slice %227 {offsets = [2, 0], sizes = [1, 256], strides = [1, 1]} : vector<4x256xf32> to vector<1x256xf32>
    %683 = vector.broadcast %55 : f32 to vector<1x256xf32>
    %684 = arith.mulf %683, %682 : vector<1x256xf32>
    %685 = vector.extract_strided_slice %227 {offsets = [3, 0], sizes = [1, 256], strides = [1, 1]} : vector<4x256xf32> to vector<1x256xf32>
    %686 = vector.broadcast %56 : f32 to vector<1x256xf32>
    %687 = arith.mulf %686, %685 : vector<1x256xf32>
    %688 = arith.addf %684, %687 : vector<1x256xf32>
    %689 = vector.extract_strided_slice %231 {offsets = [2, 0], sizes = [1, 256], strides = [1, 1]} : vector<4x256xf32> to vector<1x256xf32>
    %690 = vector.broadcast %57 : f32 to vector<1x256xf32>
    %691 = arith.mulf %690, %689 : vector<1x256xf32>
    %692 = arith.addf %688, %691 : vector<1x256xf32>
    %693 = vector.extract_strided_slice %231 {offsets = [3, 0], sizes = [1, 256], strides = [1, 1]} : vector<4x256xf32> to vector<1x256xf32>
    %694 = vector.broadcast %58 : f32 to vector<1x256xf32>
    %695 = arith.mulf %694, %693 : vector<1x256xf32>
    %696 = arith.addf %692, %695 : vector<1x256xf32>
    %697 = vector.extract_strided_slice %235 {offsets = [2, 0], sizes = [1, 256], strides = [1, 1]} : vector<4x256xf32> to vector<1x256xf32>
    %698 = vector.broadcast %59 : f32 to vector<1x256xf32>
    %699 = arith.mulf %698, %697 : vector<1x256xf32>
    %700 = arith.addf %696, %699 : vector<1x256xf32>
    %701 = vector.extract_strided_slice %235 {offsets = [3, 0], sizes = [1, 256], strides = [1, 1]} : vector<4x256xf32> to vector<1x256xf32>
    %702 = vector.broadcast %60 : f32 to vector<1x256xf32>
    %703 = arith.mulf %702, %701 : vector<1x256xf32>
    %704 = arith.addf %700, %703 : vector<1x256xf32>
    %705 = vector.extract_strided_slice %239 {offsets = [2, 0], sizes = [1, 256], strides = [1, 1]} : vector<4x256xf32> to vector<1x256xf32>
    %706 = vector.broadcast %61 : f32 to vector<1x256xf32>
    %707 = arith.mulf %706, %705 : vector<1x256xf32>
    %708 = arith.addf %704, %707 : vector<1x256xf32>
    %709 = vector.extract_strided_slice %239 {offsets = [3, 0], sizes = [1, 256], strides = [1, 1]} : vector<4x256xf32> to vector<1x256xf32>
    %710 = vector.broadcast %62 : f32 to vector<1x256xf32>
    %711 = arith.mulf %710, %709 : vector<1x256xf32>
    %712 = arith.addf %708, %711 : vector<1x256xf32>
    %713 = vector.extract_strided_slice %223 {offsets = [2, 0], sizes = [1, 256], strides = [1, 1]} : vector<4x256xf32> to vector<1x256xf32>
    %714 = vector.broadcast %63 : f32 to vector<1x256xf32>
    %715 = arith.mulf %714, %713 : vector<1x256xf32>
    %716 = arith.addf %712, %715 : vector<1x256xf32>
    %717 = vector.extract_strided_slice %223 {offsets = [3, 0], sizes = [1, 256], strides = [1, 1]} : vector<4x256xf32> to vector<1x256xf32>
    %718 = vector.broadcast %64 : f32 to vector<1x256xf32>
    %719 = arith.mulf %718, %717 : vector<1x256xf32>
    %720 = arith.addf %716, %719 : vector<1x256xf32>
    %721 = vector.extract_strided_slice %243 {offsets = [2, 0], sizes = [1, 256], strides = [1, 1]} : vector<4x256xf32> to vector<1x256xf32>
    %722 = vector.broadcast %65 : f32 to vector<1x256xf32>
    %723 = arith.mulf %722, %721 : vector<1x256xf32>
    %724 = arith.addf %720, %723 : vector<1x256xf32>
    %725 = vector.extract_strided_slice %243 {offsets = [3, 0], sizes = [1, 256], strides = [1, 1]} : vector<4x256xf32> to vector<1x256xf32>
    %726 = vector.broadcast %66 : f32 to vector<1x256xf32>
    %727 = arith.mulf %726, %725 : vector<1x256xf32>
    %728 = arith.addf %724, %727 : vector<1x256xf32>
    %729 = vector.extract_strided_slice %247 {offsets = [2, 0], sizes = [1, 256], strides = [1, 1]} : vector<4x256xf32> to vector<1x256xf32>
    %730 = vector.broadcast %67 : f32 to vector<1x256xf32>
    %731 = arith.mulf %730, %729 : vector<1x256xf32>
    %732 = arith.addf %728, %731 : vector<1x256xf32>
    %733 = vector.extract_strided_slice %247 {offsets = [3, 0], sizes = [1, 256], strides = [1, 1]} : vector<4x256xf32> to vector<1x256xf32>
    %734 = vector.broadcast %68 : f32 to vector<1x256xf32>
    %735 = arith.mulf %734, %733 : vector<1x256xf32>
    %736 = arith.addf %732, %735 : vector<1x256xf32>
    %737 = vector.extract_strided_slice %251 {offsets = [2, 0], sizes = [1, 256], strides = [1, 1]} : vector<4x256xf32> to vector<1x256xf32>
    %738 = vector.broadcast %69 : f32 to vector<1x256xf32>
    %739 = arith.mulf %738, %737 : vector<1x256xf32>
    %740 = arith.addf %736, %739 : vector<1x256xf32>
    %741 = vector.extract_strided_slice %251 {offsets = [3, 0], sizes = [1, 256], strides = [1, 1]} : vector<4x256xf32> to vector<1x256xf32>
    %742 = vector.broadcast %70 : f32 to vector<1x256xf32>
    %743 = arith.mulf %742, %741 : vector<1x256xf32>
    %744 = arith.addf %740, %743 : vector<1x256xf32>
    %745 = vector.extract_strided_slice %255 {offsets = [2, 0], sizes = [1, 256], strides = [1, 1]} : vector<4x256xf32> to vector<1x256xf32>
    %746 = vector.broadcast %71 : f32 to vector<1x256xf32>
    %747 = arith.mulf %746, %745 : vector<1x256xf32>
    %748 = arith.addf %744, %747 : vector<1x256xf32>
    %749 = vector.extract_strided_slice %255 {offsets = [3, 0], sizes = [1, 256], strides = [1, 1]} : vector<4x256xf32> to vector<1x256xf32>
    %750 = vector.broadcast %72 : f32 to vector<1x256xf32>
    %751 = arith.mulf %750, %749 : vector<1x256xf32>
    %752 = arith.addf %748, %751 : vector<1x256xf32>
    %753 = vector.extract_strided_slice %227 {offsets = [2, 0], sizes = [1, 256], strides = [1, 1]} : vector<4x256xf32> to vector<1x256xf32>
    %754 = vector.broadcast %73 : f32 to vector<1x256xf32>
    %755 = arith.mulf %754, %753 : vector<1x256xf32>
    %756 = vector.extract_strided_slice %227 {offsets = [3, 0], sizes = [1, 256], strides = [1, 1]} : vector<4x256xf32> to vector<1x256xf32>
    %757 = vector.broadcast %74 : f32 to vector<1x256xf32>
    %758 = arith.mulf %757, %756 : vector<1x256xf32>
    %759 = arith.addf %755, %758 : vector<1x256xf32>
    %760 = vector.extract_strided_slice %231 {offsets = [2, 0], sizes = [1, 256], strides = [1, 1]} : vector<4x256xf32> to vector<1x256xf32>
    %761 = vector.broadcast %75 : f32 to vector<1x256xf32>
    %762 = arith.mulf %761, %760 : vector<1x256xf32>
    %763 = arith.addf %759, %762 : vector<1x256xf32>
    %764 = vector.extract_strided_slice %231 {offsets = [3, 0], sizes = [1, 256], strides = [1, 1]} : vector<4x256xf32> to vector<1x256xf32>
    %765 = vector.broadcast %76 : f32 to vector<1x256xf32>
    %766 = arith.mulf %765, %764 : vector<1x256xf32>
    %767 = arith.addf %763, %766 : vector<1x256xf32>
    %768 = vector.extract_strided_slice %235 {offsets = [2, 0], sizes = [1, 256], strides = [1, 1]} : vector<4x256xf32> to vector<1x256xf32>
    %769 = vector.broadcast %77 : f32 to vector<1x256xf32>
    %770 = arith.mulf %769, %768 : vector<1x256xf32>
    %771 = arith.addf %767, %770 : vector<1x256xf32>
    %772 = vector.extract_strided_slice %235 {offsets = [3, 0], sizes = [1, 256], strides = [1, 1]} : vector<4x256xf32> to vector<1x256xf32>
    %773 = vector.broadcast %78 : f32 to vector<1x256xf32>
    %774 = arith.mulf %773, %772 : vector<1x256xf32>
    %775 = arith.addf %771, %774 : vector<1x256xf32>
    %776 = vector.extract_strided_slice %239 {offsets = [2, 0], sizes = [1, 256], strides = [1, 1]} : vector<4x256xf32> to vector<1x256xf32>
    %777 = vector.broadcast %79 : f32 to vector<1x256xf32>
    %778 = arith.mulf %777, %776 : vector<1x256xf32>
    %779 = arith.addf %775, %778 : vector<1x256xf32>
    %780 = vector.extract_strided_slice %239 {offsets = [3, 0], sizes = [1, 256], strides = [1, 1]} : vector<4x256xf32> to vector<1x256xf32>
    %781 = vector.broadcast %80 : f32 to vector<1x256xf32>
    %782 = arith.mulf %781, %780 : vector<1x256xf32>
    %783 = arith.addf %779, %782 : vector<1x256xf32>
    %784 = vector.extract_strided_slice %223 {offsets = [2, 0], sizes = [1, 256], strides = [1, 1]} : vector<4x256xf32> to vector<1x256xf32>
    %785 = vector.broadcast %81 : f32 to vector<1x256xf32>
    %786 = arith.mulf %785, %784 : vector<1x256xf32>
    %787 = arith.addf %783, %786 : vector<1x256xf32>
    %788 = vector.extract_strided_slice %223 {offsets = [3, 0], sizes = [1, 256], strides = [1, 1]} : vector<4x256xf32> to vector<1x256xf32>
    %789 = vector.broadcast %82 : f32 to vector<1x256xf32>
    %790 = arith.mulf %789, %788 : vector<1x256xf32>
    %791 = arith.addf %787, %790 : vector<1x256xf32>
    %792 = vector.extract_strided_slice %243 {offsets = [2, 0], sizes = [1, 256], strides = [1, 1]} : vector<4x256xf32> to vector<1x256xf32>
    %793 = vector.broadcast %83 : f32 to vector<1x256xf32>
    %794 = arith.mulf %793, %792 : vector<1x256xf32>
    %795 = arith.addf %791, %794 : vector<1x256xf32>
    %796 = vector.extract_strided_slice %243 {offsets = [3, 0], sizes = [1, 256], strides = [1, 1]} : vector<4x256xf32> to vector<1x256xf32>
    %797 = vector.broadcast %84 : f32 to vector<1x256xf32>
    %798 = arith.mulf %797, %796 : vector<1x256xf32>
    %799 = arith.addf %795, %798 : vector<1x256xf32>
    %800 = vector.extract_strided_slice %247 {offsets = [2, 0], sizes = [1, 256], strides = [1, 1]} : vector<4x256xf32> to vector<1x256xf32>
    %801 = vector.broadcast %85 : f32 to vector<1x256xf32>
    %802 = arith.mulf %801, %800 : vector<1x256xf32>
    %803 = arith.addf %799, %802 : vector<1x256xf32>
    %804 = vector.extract_strided_slice %247 {offsets = [3, 0], sizes = [1, 256], strides = [1, 1]} : vector<4x256xf32> to vector<1x256xf32>
    %805 = vector.broadcast %86 : f32 to vector<1x256xf32>
    %806 = arith.mulf %805, %804 : vector<1x256xf32>
    %807 = arith.addf %803, %806 : vector<1x256xf32>
    %808 = vector.extract_strided_slice %251 {offsets = [2, 0], sizes = [1, 256], strides = [1, 1]} : vector<4x256xf32> to vector<1x256xf32>
    %809 = vector.broadcast %87 : f32 to vector<1x256xf32>
    %810 = arith.mulf %809, %808 : vector<1x256xf32>
    %811 = arith.addf %807, %810 : vector<1x256xf32>
    %812 = vector.extract_strided_slice %251 {offsets = [3, 0], sizes = [1, 256], strides = [1, 1]} : vector<4x256xf32> to vector<1x256xf32>
    %813 = vector.broadcast %88 : f32 to vector<1x256xf32>
    %814 = arith.mulf %813, %812 : vector<1x256xf32>
    %815 = arith.addf %811, %814 : vector<1x256xf32>
    %816 = vector.extract_strided_slice %255 {offsets = [2, 0], sizes = [1, 256], strides = [1, 1]} : vector<4x256xf32> to vector<1x256xf32>
    %817 = vector.broadcast %89 : f32 to vector<1x256xf32>
    %818 = arith.mulf %817, %816 : vector<1x256xf32>
    %819 = arith.addf %815, %818 : vector<1x256xf32>
    %820 = vector.extract_strided_slice %255 {offsets = [3, 0], sizes = [1, 256], strides = [1, 1]} : vector<4x256xf32> to vector<1x256xf32>
    %821 = vector.broadcast %90 : f32 to vector<1x256xf32>
    %822 = arith.mulf %821, %820 : vector<1x256xf32>
    %823 = arith.addf %819, %822 : vector<1x256xf32>
    %824 = tpu.concatenate %326, %397, %468, %539, %610, %681, %752, %823 in 0 : vector<1x256xf32>, vector<1x256xf32>, vector<1x256xf32>, vector<1x256xf32>, vector<1x256xf32>, vector<1x256xf32>, vector<1x256xf32>, vector<1x256xf32> -> vector<8x256xf32>
    %825 = arith.negf %824 : vector<8x256xf32>
    %826 = math.exp %825 : vector<8x256xf32>
    %cst_25 = arith.constant 1.000000e+00 : f32
    %827 = vector.broadcast %cst_25 : f32 to vector<8x256xf32>
    %828 = arith.addf %827, %826 : vector<8x256xf32>
    %829 = arith.divf %827, %828 : vector<8x256xf32>
    %830 = arith.mulf %829, %1 : vector<8x256xf32>
    %831 = arith.addf %830, %0 : vector<8x256xf32>
    %c0_26 = arith.constant 0 : index
    %c0_27 = arith.constant 0 : index
    %832 = vector.load %arg7[%c0_26, %c0_27] : memref<8x256xf32, #tpu.memory_space<vmem>>, vector<8x256xf32>
    tpu.vector_store %arg7[%c0_26, %c0_27], %831 {strides = array<i32>} : memref<8x256xf32, #tpu.memory_space<vmem>>, vector<8x256xf32>,
    return
  }
  func.func @transform_0(%arg0: i32) -> (i32, i32) {
    %c0_i32 = arith.constant 0 : i32
    %c0_i32_0 = arith.constant 0 : i32
    %c0_i32_1 = arith.constant 0 : i32
    return %c0_i32, %c0_i32_0 : i32, i32
  }
  func.func @transform_1(%arg0: i32) -> (i32, i32) {
    %c0_i32 = arith.constant 0 : i32
    %c0_i32_0 = arith.constant 0 : i32
    %c0_i32_1 = arith.constant 0 : i32
    return %c0_i32, %c0_i32_0 : i32, i32
  }
  func.func @transform_2(%arg0: i32) -> i32 {
    %c0_i32 = arith.constant 0 : i32
    %c0_i32_0 = arith.constant 0 : i32
    return %c0_i32 : i32
  }
  func.func @transform_3(%arg0: i32) -> i32 {
    %c0_i32 = arith.constant 0 : i32
    %c0_i32_0 = arith.constant 0 : i32
    return %c0_i32 : i32
  }
  func.func @transform_4(%arg0: i32) -> i32 {
    %c0_i32 = arith.constant 0 : i32
    %c0_i32_0 = arith.constant 0 : i32
    return %c0_i32 : i32
  }
  func.func @transform_5(%arg0: i32) -> (i32, i32) {
    %c0_i32 = arith.constant 0 : i32
    %c0_i32_0 = arith.constant 0 : i32
    %c0_i32_1 = arith.constant 0 : i32
    return %c0_i32, %c0_i32_0 : i32, i32
  }
  func.func @transform_6(%arg0: i32) -> (i32, i32) {
    %c0_i32 = arith.constant 0 : i32
    %c0_i32_0 = arith.constant 0 : i32
    %c0_i32_1 = arith.constant 0 : i32
    return %c0_i32, %c0_i32_0 : i32, i32
  }
}

</mosaic_0001>

<llo_original>
// kernel: tpu_custom_call.1
$region0: #{tpu_custom_call.1}
  #allocation0 [shape = 'u32[]', space=smem, size = 0x4, offset = 0x4, fixed_abs, tag = 'smem constant byte address 0x4 - core index']
  #allocation1 [shape = 'u32[144,128]{1,0:T(1,128)}', space=vmem, size = 0x12000, scoped, tag = 'internal scratch']
  %s0 = inlined_call_operand.hbm [shape: f32[8,256], index: 0, kind: input, shape index: {}]
  %s1 = inlined_call_operand.hbm [shape: f32[8,256], index: 1, kind: input, shape index: {}]
  %s2 = inlined_call_operand.vmem [shape: f32[8], index: 2, kind: input, shape index: {}]
  %s3 = inlined_call_operand.vmem [shape: f32[8], index: 3, kind: input, shape index: {}]
  %s4 = inlined_call_operand.hbm [shape: f32[72], index: 4, kind: input, shape index: {}]
  %s5 = inlined_call_operand.vmem [shape: f32[8,256], index: 5, kind: input, shape index: {}]
  %s6 = inlined_call_operand.hbm [shape: f32[8,256], index: 6, kind: output, shape index: {}]
  %s7 = sld [smem:[#allocation0]]
  $region54: #{tpu_custom_call.1} parent=0
    _
  %s9 = ssub.s32 1, %s7
  %s10 = scalar_select 0, %s9, %s7
  $region1: #{tpu_custom_call.1} parent=0
    #allocation2 [shape = 'u8[8192]{0}', space=vmem, size = 0x2000, scoped, tag = 'input window, operand 0, single buffered']
    #allocation3 [shape = 's32[1]{0}', space=sflag, size = 0x4, scoped, tag = 'scoped memory for tpu_custom_call.1']
    #allocation4 [shape = 's32[1]{0}', space=sflag, size = 0x4, scoped, tag = 'scoped memory for tpu_custom_call.1']
    #allocation5 [shape = 's32[1]{0}', space=sflag, size = 0x4, scoped, tag = 'scoped memory for tpu_custom_call.1']
    #allocation6 [shape = 's32[1]{0}', space=sflag, size = 0x4, scoped, tag = 'scoped memory for tpu_custom_call.1']
    #allocation7 [shape = 'u8[8192]{0}', space=vmem, size = 0x2000, scoped, tag = 'input window, operand 1, single buffered']
    #allocation8 [shape = 's32[1]{0}', space=sflag, size = 0x4, scoped, tag = 'scoped memory for tpu_custom_call.1']
    #allocation9 [shape = 'u8[512]{0}', space=smem, size = 0x200, scoped, tag = 'input window, operand 2, single buffered']
    #allocation10 [shape = 'u8[512]{0}', space=smem, size = 0x200, scoped, tag = 'input window, operand 3, single buffered']
    #allocation11 [shape = 's32[1]{0}', space=sflag, size = 0x4, scoped, tag = 'scoped memory for tpu_custom_call.1']
    #allocation12 [shape = 'u8[512]{0}', space=smem, size = 0x200, scoped, tag = 'input window, operand 4, single buffered']
    #allocation13 [shape = 'u8[8192]{0}', space=vmem, size = 0x2000, scoped, tag = 'output window, operand 0, single buffered']
    %11 = vsyncpa [#allocation3], 0
    %12 = vsyncpa [#allocation8], 0
    %13 = vsyncpa [#allocation6], 0
    %14 = vsyncpa [#allocation11], 0
    %15 = vsyncpa [#allocation5], 0
    %16 = vsyncpa [#allocation4], 0
    // Predicated region
    $region2: #{tpu_custom_call.1} parent=1 // pred_check
      _
    $region3: #{tpu_custom_call.1} parent=1 // pred_check_branch
      %18 = sbr.rel (0) target = $region5
    $region4: #{tpu_custom_call.1} parent=1 // pred_region
      %s20 = ssub.s32 256, 256
      %21 = vsyncadd [#allocation3], %s20
      %s23 = sshll.u32 [#allocation2], 4
      %s24 = int_to_ptr.vmem [resolvable:$true] %s23
      %26 = dma.hbm_to_vmem [thread:$0]  %s0, 256, %s24, [#allocation3]
    $region5: #{tpu_custom_call.1} parent=1 // pred_fallthru
      _
    // Predicated region
    $region6: #{tpu_custom_call.1} parent=1 // pred_check
      _
    $region7: #{tpu_custom_call.1} parent=1 // pred_check_branch
      %28 = sbr.rel (0) target = $region9
    $region8: #{tpu_custom_call.1} parent=1 // pred_region
      %s30 = ssub.s32 256, 256
      %31 = vsyncadd [#allocation8], %s30
      %s33 = sshll.u32 [#allocation7], 4
      %s34 = int_to_ptr.vmem [resolvable:$true] %s33
      %36 = dma.hbm_to_vmem [thread:$0]  %s1, 256, %s34, [#allocation8]
    $region9: #{tpu_custom_call.1} parent=1 // pred_fallthru
      _
    // Predicated region
    $region10: #{tpu_custom_call.1} parent=1 // pred_check
      _
    $region11: #{tpu_custom_call.1} parent=1 // pred_check_branch
      %38 = sbr.rel (0) target = $region13
    $region12: #{tpu_custom_call.1} parent=1 // pred_region
      %s40 = ssub.s32 16, 16
      %41 = vsyncadd [#allocation6], %s40
      %s43 = sshll.u32 %s2, 4
      %s44 = int_to_ptr.vmem [resolvable:$true] %s43
      %46 = dma.vmem_to_smem %s44, 16, [#allocation9], [#allocation6]
    $region13: #{tpu_custom_call.1} parent=1 // pred_fallthru
      _
    // Predicated region
    $region14: #{tpu_custom_call.1} parent=1 // pred_check
      _
    $region15: #{tpu_custom_call.1} parent=1 // pred_check_branch
      %48 = sbr.rel (0) target = $region17
    $region16: #{tpu_custom_call.1} parent=1 // pred_region
      %s50 = ssub.s32 16, 16
      %51 = vsyncadd [#allocation11], %s50
      %s53 = sshll.u32 %s3, 4
      %s54 = int_to_ptr.vmem [resolvable:$true] %s53
      %56 = dma.vmem_to_smem %s54, 16, [#allocation10], [#allocation11]
    $region17: #{tpu_custom_call.1} parent=1 // pred_fallthru
      _
    // Predicated region
    $region18: #{tpu_custom_call.1} parent=1 // pred_check
      _
    $region19: #{tpu_custom_call.1} parent=1 // pred_check_branch
      %58 = sbr.rel (0) target = $region21
    $region20: #{tpu_custom_call.1} parent=1 // pred_region
      %s60 = ssub.s32 16, 16
      %61 = vsyncadd [#allocation5], %s60
      %64 = dma.hbm_to_smem %s4, 16, [#allocation12], [#allocation5]
    $region21: #{tpu_custom_call.1} parent=1 // pred_fallthru
      _
    // Predicated region
    $region22: #{tpu_custom_call.1} parent=1 // pred_check
      _
    $region23: #{tpu_custom_call.1} parent=1 // pred_check_branch
      %66 = sbr.rel (0) target = $region25
    $region24: #{tpu_custom_call.1} parent=1 // pred_region
      _
    $region25: #{tpu_custom_call.1} parent=1 // pred_fallthru
      _
    // Predicated region
    $region26: #{tpu_custom_call.1} parent=1 // pred_check
      _
    $region27: #{tpu_custom_call.1} parent=1 // pred_check_branch
      %68 = sbr.rel (0) target = $region29
    $region28: #{tpu_custom_call.1} parent=1 // pred_region
      %69 = dma.done [#allocation3], 256
    $region29: #{tpu_custom_call.1} parent=1 // pred_fallthru
      _
    // Predicated region
    $region30: #{tpu_custom_call.1} parent=1 // pred_check
      _
    $region31: #{tpu_custom_call.1} parent=1 // pred_check_branch
      %71 = sbr.rel (0) target = $region33
    $region32: #{tpu_custom_call.1} parent=1 // pred_region
      %72 = dma.done [#allocation8], 256
    $region33: #{tpu_custom_call.1} parent=1 // pred_fallthru
      _
    // Predicated region
    $region34: #{tpu_custom_call.1} parent=1 // pred_check
      _
    $region35: #{tpu_custom_call.1} parent=1 // pred_check_branch
      %74 = sbr.rel (0) target = $region37
    $region36: #{tpu_custom_call.1} parent=1 // pred_region
      %75 = dma.done [#allocation6], 16
    $region37: #{tpu_custom_call.1} parent=1 // pred_fallthru
      _
    // Predicated region
    $region38: #{tpu_custom_call.1} parent=1 // pred_check
      _
    $region39: #{tpu_custom_call.1} parent=1 // pred_check_branch
      %77 = sbr.rel (0) target = $region41
    $region40: #{tpu_custom_call.1} parent=1 // pred_region
      %78 = dma.done [#allocation11], 16
    $region41: #{tpu_custom_call.1} parent=1 // pred_fallthru
      _
    // Predicated region
    $region42: #{tpu_custom_call.1} parent=1 // pred_check
      _
    $region43: #{tpu_custom_call.1} parent=1 // pred_check_branch
      %80 = sbr.rel (0) target = $region45
    $region44: #{tpu_custom_call.1} parent=1 // pred_region
      %81 = dma.done [#allocation5], 16
    $region45: #{tpu_custom_call.1} parent=1 // pred_fallthru
      _
    %82 = sfence
    %v83 = vld [vmem:[#allocation2] sm:$0xff]
    %v84 = vld [vmem:[#allocation2 + $0x8] sm:$0xff]
    %v85 = vld [vmem:[#allocation7] sm:$0xff]
    %v86 = vld [vmem:[#allocation7 + $0x8] sm:$0xff]
    %v87 = vld [vmem:[%s5] sm:$0xff]
    %v88 = vld [vmem:[%s5 + $0x8] sm:$0xff]
    %s89 = sld [smem:[#allocation9]]
    %s90 = sld [smem:[#allocation9 + $0x1]]
    %s91 = sld [smem:[#allocation9 + $0x2]]
    %s92 = sld [smem:[#allocation9 + $0x3]]
    %s93 = sld [smem:[#allocation9 + $0x4]]
    %s94 = sld [smem:[#allocation9 + $0x5]]
    %s95 = sld [smem:[#allocation9 + $0x6]]
    %s96 = sld [smem:[#allocation9 + $0x7]]
    %s97 = sld [smem:[#allocation10]]
    %s98 = sld [smem:[#allocation10 + $0x1]]
    %s99 = sld [smem:[#allocation10 + $0x2]]
    %s100 = sld [smem:[#allocation10 + $0x3]]
    %s101 = sld [smem:[#allocation10 + $0x4]]
    %s102 = sld [smem:[#allocation10 + $0x5]]
    %s103 = sld [smem:[#allocation10 + $0x6]]
    %s104 = sld [smem:[#allocation10 + $0x7]]
    %s105 = sld [smem:[#allocation12]]
    %s106 = sld [smem:[#allocation12 + $0x1]]
    %s107 = sld [smem:[#allocation12 + $0x2]]
    %s108 = sld [smem:[#allocation12 + $0x3]]
    %s109 = sld [smem:[#allocation12 + $0x4]]
    %s110 = sld [smem:[#allocation12 + $0x5]]
    %s111 = sld [smem:[#allocation12 + $0x6]]
    %s112 = sld [smem:[#allocation12 + $0x7]]
    %s113 = sld [smem:[#allocation12 + $0x8]]
    %s114 = sld [smem:[#allocation12 + $0x9]]
    %s115 = sld [smem:[#allocation12 + $0xa]]
    %s116 = sld [smem:[#allocation12 + $0xb]]
    %s117 = sld [smem:[#allocation12 + $0xc]]
    %s118 = sld [smem:[#allocation12 + $0xd]]
    %s119 = sld [smem:[#allocation12 + $0xe]]
    %s120 = sld [smem:[#allocation12 + $0xf]]
    %s121 = sld [smem:[#allocation12 + $0x10]]
    %s122 = sld [smem:[#allocation12 + $0x11]]
    %s123 = sld [smem:[#allocation12 + $0x12]]
    %s124 = sld [smem:[#allocation12 + $0x13]]
    %s125 = sld [smem:[#allocation12 + $0x14]]
    %s126 = sld [smem:[#allocation12 + $0x15]]
    %s127 = sld [smem:[#allocation12 + $0x16]]
    %s128 = sld [smem:[#allocation12 + $0x17]]
    %s129 = sld [smem:[#allocation12 + $0x18]]
    %s130 = sld [smem:[#allocation12 + $0x19]]
    %s131 = sld [smem:[#allocation12 + $0x1a]]
    %s132 = sld [smem:[#allocation12 + $0x1b]]
    %s133 = sld [smem:[#allocation12 + $0x1c]]
    %s134 = sld [smem:[#allocation12 + $0x1d]]
    %s135 = sld [smem:[#allocation12 + $0x1e]]
    %s136 = sld [smem:[#allocation12 + $0x1f]]
    %s137 = sld [smem:[#allocation12 + $0x20]]
    %s138 = sld [smem:[#allocation12 + $0x21]]
    %s139 = sld [smem:[#allocation12 + $0x22]]
    %s140 = sld [smem:[#allocation12 + $0x23]]
    %s141 = sld [smem:[#allocation12 + $0x24]]
    %s142 = sld [smem:[#allocation12 + $0x25]]
    %s143 = sld [smem:[#allocation12 + $0x26]]
    %s144 = sld [smem:[#allocation12 + $0x27]]
    %s145 = sld [smem:[#allocation12 + $0x28]]
    %s146 = sld [smem:[#allocation12 + $0x29]]
    %s147 = sld [smem:[#allocation12 + $0x2a]]
    %s148 = sld [smem:[#allocation12 + $0x2b]]
    %s149 = sld [smem:[#allocation12 + $0x2c]]
    %s150 = sld [smem:[#allocation12 + $0x2d]]
    %s151 = sld [smem:[#allocation12 + $0x2e]]
    %s152 = sld [smem:[#allocation12 + $0x2f]]
    %s153 = sld [smem:[#allocation12 + $0x30]]
    %s154 = sld [smem:[#allocation12 + $0x31]]
    %s155 = sld [smem:[#allocation12 + $0x32]]
    %s156 = sld [smem:[#allocation12 + $0x33]]
    %s157 = sld [smem:[#allocation12 + $0x34]]
    %s158 = sld [smem:[#allocation12 + $0x35]]
    %s159 = sld [smem:[#allocation12 + $0x36]]
    %s160 = sld [smem:[#allocation12 + $0x37]]
    %s161 = sld [smem:[#allocation12 + $0x38]]
    %s162 = sld [smem:[#allocation12 + $0x39]]
    %s163 = sld [smem:[#allocation12 + $0x3a]]
    %s164 = sld [smem:[#allocation12 + $0x3b]]
    %s165 = sld [smem:[#allocation12 + $0x3c]]
    %s166 = sld [smem:[#allocation12 + $0x3d]]
    %s167 = sld [smem:[#allocation12 + $0x3e]]
    %s168 = sld [smem:[#allocation12 + $0x3f]]
    %s169 = sld [smem:[#allocation12 + $0x40]]
    %s170 = sld [smem:[#allocation12 + $0x41]]
    %s171 = sld [smem:[#allocation12 + $0x42]]
    %s172 = sld [smem:[#allocation12 + $0x43]]
    %s173 = sld [smem:[#allocation12 + $0x44]]
    %s174 = sld [smem:[#allocation12 + $0x45]]
    %s175 = sld [smem:[#allocation12 + $0x46]]
    %s176 = sld [smem:[#allocation12 + $0x47]]
    %v177 = vstv %s89
    %v178 = vmul.f32 %v177, %v83
    %v179 = vmul.f32 %v177, %v84
    %v180 = vstv %s97
    %v181 = vmul.f32 %v180, %v85
    %v182 = vmul.f32 %v180, %v86
    %v183 = vadd.f32 %v178, %v181
    %v184 = vadd.f32 %v179, %v182
    %v185 = vstv %s90
    %v186 = vmul.f32 %v185, %v83
    %v187 = vmul.f32 %v185, %v84
    %v188 = vstv %s98
    %v189 = vmul.f32 %v188, %v85
    %v190 = vmul.f32 %v188, %v86
    %v191 = vadd.f32 %v186, %v189
    %v192 = vadd.f32 %v187, %v190
    %v195 = vrot.slane %v191, 1
    %v196 = vrot.slane %v192, 1
    %v199 = vadd.f32 %v183, %v195
    %v200 = vadd.f32 %v184, %v196
    %v201 = vstv %s91
    %v202 = vmul.f32 %v201, %v83
    %v203 = vmul.f32 %v201, %v84
    %v204 = vstv %s99
    %v205 = vmul.f32 %v204, %v85
    %v206 = vmul.f32 %v204, %v86
    %v207 = vadd.f32 %v202, %v205
    %v208 = vadd.f32 %v203, %v206
    %v211 = vrot.slane %v207, 2
    %v212 = vrot.slane %v208, 2
    %v215 = vadd.f32 %v199, %v211
    %v216 = vadd.f32 %v200, %v212
    %v217 = vstv %s92
    %v218 = vmul.f32 %v217, %v83
    %v219 = vmul.f32 %v217, %v84
    %v220 = vstv %s100
    %v221 = vmul.f32 %v220, %v85
    %v222 = vmul.f32 %v220, %v86
    %v223 = vadd.f32 %v218, %v221
    %v224 = vadd.f32 %v219, %v222
    %v227 = vrot.slane %v223, 3
    %v228 = vrot.slane %v224, 3
    %v231 = vadd.f32 %v215, %v227
    %v232 = vadd.f32 %v216, %v228
    %v233 = vmax.f32 %v231, 0.0
    %v234 = vmax.f32 %v232, 0.0
    %v235 = vstv %s93
    %v236 = vmul.f32 %v235, %v83
    %v237 = vmul.f32 %v235, %v84
    %v238 = vstv %s101
    %v239 = vmul.f32 %v238, %v85
    %v240 = vmul.f32 %v238, %v86
    %v241 = vadd.f32 %v236, %v239
    %v242 = vadd.f32 %v237, %v240
    %v243 = vstv %s94
    %v244 = vmul.f32 %v243, %v83
    %v245 = vmul.f32 %v243, %v84
    %v246 = vstv %s102
    %v247 = vmul.f32 %v246, %v85
    %v248 = vmul.f32 %v246, %v86
    %v249 = vadd.f32 %v244, %v247
    %v250 = vadd.f32 %v245, %v248
    %v253 = vrot.slane %v249, 1
    %v254 = vrot.slane %v250, 1
    %v257 = vadd.f32 %v241, %v253
    %v258 = vadd.f32 %v242, %v254
    %v259 = vstv %s95
    %v260 = vmul.f32 %v259, %v83
    %v261 = vmul.f32 %v259, %v84
    %v262 = vstv %s103
    %v263 = vmul.f32 %v262, %v85
    %v264 = vmul.f32 %v262, %v86
    %v265 = vadd.f32 %v260, %v263
    %v266 = vadd.f32 %v261, %v264
    %v269 = vrot.slane %v265, 2
    %v270 = vrot.slane %v266, 2
    %v273 = vadd.f32 %v257, %v269
    %v274 = vadd.f32 %v258, %v270
    %v275 = vstv %s96
    %v276 = vmul.f32 %v275, %v83
    %v277 = vmul.f32 %v275, %v84
    %v278 = vstv %s104
    %v279 = vmul.f32 %v278, %v85
    %v280 = vmul.f32 %v278, %v86
    %v281 = vadd.f32 %v276, %v279
    %v282 = vadd.f32 %v277, %v280
    %v285 = vrot.slane %v281, 3
    %v286 = vrot.slane %v282, 3
    %v289 = vadd.f32 %v273, %v285
    %v290 = vadd.f32 %v274, %v286
    %v291 = vmax.f32 %v289, 0.0
    %v292 = vmax.f32 %v290, 0.0
    %v295 = vrot.slane %v291, 7
    %v296 = vrot.slane %v292, 7
    %v301 = vrot.slane %v233, 2
    %v302 = vrot.slane %v234, 2
    %v305 = vrot.slane %v291, 1
    %v306 = vrot.slane %v292, 1
    %vm309 = vcmask 1040384
    %v310 = vsel %vm309, %v233, %v295
    %v311 = vsel %vm309, %v234, %v296
    %vm312 = vcmask 1041408
    %v313 = vsel %vm312, %v310, %v301
    %v314 = vsel %vm312, %v311, %v302
    %vm315 = vcmask 1042432
    %v316 = vsel %vm315, %v313, %v305
    %v317 = vsel %vm315, %v314, %v306
    %318 = vrot.lane.b32.xlu0 %v316, 17
    %v319 = vpop.permute.xlu0 %318
    %320 = vrot.lane.b32.xlu0 %v317, 17
    %v321 = vpop.permute.xlu0 %320
    %v322 = vlaneseq
    %v323 = vand.u32 %v322, 127
    %vm324 = vcmp.lt.s32.totalorder %v323, 17
    %v325 = vsel %vm324, %v319, %v321
    %v326 = vsel %vm324, %v321, %v319
    %v327 = vlaneseq
    %v328 = vshrl.u32 %v327, 7
    %v329 = vsub.s32 0, %v328
    %v330 = vrot.slane %v87, %v329
    %v331 = vlaneseq
    %v332 = vshrl.u32 %v331, 7
    %v333 = vsub.s32 0, %v332
    %v334 = vrot.slane %v88, %v333
    %v335 = vmul.f32 %v326, %v330
    %v336 = vmul.f32 %v325, %v334
    %337 = vrot.lane.b32.xlu0 %v316, 16
    %v338 = vpop.permute.xlu0 %337
    %339 = vrot.lane.b32.xlu0 %v317, 16
    %v340 = vpop.permute.xlu0 %339
    %vm341 = vcmp.lt.s32.totalorder %v323, 16
    %v342 = vsel %vm341, %v338, %v340
    %v343 = vsel %vm341, %v340, %v338
    %v344 = vlaneseq
    %v345 = vshrl.u32 %v344, 7
    %v346 = vsub.s32 1, %v345
    %v347 = vrot.slane %v87, %v346
    %v348 = vlaneseq
    %v349 = vshrl.u32 %v348, 7
    %v350 = vsub.s32 1, %v349
    %v351 = vrot.slane %v88, %v350
    %v352 = vmul.f32 %v343, %v347
    %v353 = vmul.f32 %v342, %v351
    %354 = vrot.lane.b32.xlu0 %v316, 15
    %v355 = vpop.permute.xlu0 %354
    %356 = vrot.lane.b32.xlu0 %v317, 15
    %v357 = vpop.permute.xlu0 %356
    %vm358 = vcmp.lt.s32.totalorder %v323, 15
    %v359 = vsel %vm358, %v355, %v357
    %v360 = vsel %vm358, %v357, %v355
    %v361 = vlaneseq
    %v362 = vshrl.u32 %v361, 7
    %v363 = vsub.s32 2, %v362
    %v364 = vrot.slane %v87, %v363
    %v365 = vlaneseq
    %v366 = vshrl.u32 %v365, 7
    %v367 = vsub.s32 2, %v366
    %v368 = vrot.slane %v88, %v367
    %v369 = vmul.f32 %v360, %v364
    %v370 = vmul.f32 %v359, %v368
    %371 = vrot.lane.b32.xlu0 %v316, 1
    %v372 = vpop.permute.xlu0 %371
    %373 = vrot.lane.b32.xlu0 %v317, 1
    %v374 = vpop.permute.xlu0 %373
    %vm375 = vcmp.lt.s32.totalorder %v323, 1
    %v376 = vsel %vm375, %v372, %v374
    %v377 = vsel %vm375, %v374, %v372
    %v378 = vlaneseq
    %v379 = vshrl.u32 %v378, 7
    %v380 = vsub.s32 3, %v379
    %v381 = vrot.slane %v87, %v380
    %v382 = vlaneseq
    %v383 = vshrl.u32 %v382, 7
    %v384 = vsub.s32 3, %v383
    %v385 = vrot.slane %v88, %v384
    %v386 = vmul.f32 %v377, %v381
    %v387 = vmul.f32 %v376, %v385
    %388 = vrot.lane.b32.xlu0 %v316, 127
    %v389 = vpop.permute.xlu0 %388
    %390 = vrot.lane.b32.xlu0 %v317, 127
    %v391 = vpop.permute.xlu0 %390
    %vm392 = vcmp.lt.s32.totalorder %v323, 127
    %v393 = vsel %vm392, %v389, %v391
    %v394 = vsel %vm392, %v391, %v389
    %v395 = vlaneseq
    %v396 = vshrl.u32 %v395, 7
    %v397 = vsub.s32 4, %v396
    %v398 = vrot.slane %v87, %v397
    %v399 = vlaneseq
    %v400 = vshrl.u32 %v399, 7
    %v401 = vsub.s32 4, %v400
    %v402 = vrot.slane %v88, %v401
    %v403 = vmul.f32 %v393, %v398
    %v404 = vmul.f32 %v394, %v402
    %405 = vrot.lane.b32.xlu0 %v316, 113
    %v406 = vpop.permute.xlu0 %405
    %407 = vrot.lane.b32.xlu0 %v317, 113
    %v408 = vpop.permute.xlu0 %407
    %vm409 = vcmp.lt.s32.totalorder %v323, 113
    %v410 = vsel %vm409, %v406, %v408
    %v411 = vsel %vm409, %v408, %v406
    %v412 = vlaneseq
    %v413 = vshrl.u32 %v412, 7
    %v414 = vsub.s32 5, %v413
    %v415 = vrot.slane %v87, %v414
    %v416 = vlaneseq
    %v417 = vshrl.u32 %v416, 7
    %v418 = vsub.s32 5, %v417
    %v419 = vrot.slane %v88, %v418
    %v420 = vmul.f32 %v410, %v415
    %v421 = vmul.f32 %v411, %v419
    %422 = vrot.lane.b32.xlu0 %v316, 112
    %v423 = vpop.permute.xlu0 %422
    %424 = vrot.lane.b32.xlu0 %v317, 112
    %v425 = vpop.permute.xlu0 %424
    %vm426 = vcmp.lt.s32.totalorder %v323, 112
    %v427 = vsel %vm426, %v423, %v425
    %v428 = vsel %vm426, %v425, %v423
    %v429 = vlaneseq
    %v430 = vshrl.u32 %v429, 7
    %v431 = vsub.s32 6, %v430
    %v432 = vrot.slane %v87, %v431
    %v433 = vlaneseq
    %v434 = vshrl.u32 %v433, 7
    %v435 = vsub.s32 6, %v434
    %v436 = vrot.slane %v88, %v435
    %v437 = vmul.f32 %v427, %v432
    %v438 = vmul.f32 %v428, %v436
    %439 = vrot.lane.b32.xlu0 %v316, 111
    %v440 = vpop.permute.xlu0 %439
    %441 = vrot.lane.b32.xlu0 %v317, 111
    %v442 = vpop.permute.xlu0 %441
    %vm443 = vcmp.lt.s32.totalorder %v323, 111
    %v444 = vsel %vm443, %v440, %v442
    %v445 = vsel %vm443, %v442, %v440
    %v446 = vlaneseq
    %v447 = vshrl.u32 %v446, 7
    %v448 = vsub.s32 7, %v447
    %v449 = vrot.slane %v87, %v448
    %v450 = vlaneseq
    %v451 = vshrl.u32 %v450, 7
    %v452 = vsub.s32 7, %v451
    %v453 = vrot.slane %v88, %v452
    %v454 = vmul.f32 %v444, %v449
    %v455 = vmul.f32 %v445, %v453
    %v456 = vstv %s105
    %v457 = vmul.f32 %v456, %v335
    %v458 = vmul.f32 %v456, %v336
    %v459 = vstv %s106
    %v460 = vmul.f32 %v459, %v335
    %v461 = vmul.f32 %v459, %v336
    %v464 = vrot.slane %v460, 1
    %v465 = vrot.slane %v461, 1
    %v468 = vadd.f32 %v457, %v464
    %v469 = vadd.f32 %v458, %v465
    %v470 = vstv %s107
    %v471 = vmul.f32 %v470, %v352
    %v472 = vmul.f32 %v470, %v353
    %v473 = vadd.f32 %v468, %v471
    %v474 = vadd.f32 %v469, %v472
    %v475 = vstv %s108
    %v476 = vmul.f32 %v475, %v352
    %v477 = vmul.f32 %v475, %v353
    %v480 = vrot.slane %v476, 1
    %v481 = vrot.slane %v477, 1
    %v484 = vadd.f32 %v473, %v480
    %v485 = vadd.f32 %v474, %v481
    %v486 = vstv %s109
    %v487 = vmul.f32 %v486, %v369
    %v488 = vmul.f32 %v486, %v370
    %v489 = vadd.f32 %v484, %v487
    %v490 = vadd.f32 %v485, %v488
    %v491 = vstv %s110
    %v492 = vmul.f32 %v491, %v369
    %v493 = vmul.f32 %v491, %v370
    %v496 = vrot.slane %v492, 1
    %v497 = vrot.slane %v493, 1
    %v500 = vadd.f32 %v489, %v496
    %v501 = vadd.f32 %v490, %v497
    %v502 = vstv %s111
    %v503 = vmul.f32 %v502, %v386
    %v504 = vmul.f32 %v502, %v387
    %v505 = vadd.f32 %v500, %v503
    %v506 = vadd.f32 %v501, %v504
    %v507 = vstv %s112
    %v508 = vmul.f32 %v507, %v386
    %v509 = vmul.f32 %v507, %v387
    %v512 = vrot.slane %v508, 1
    %v513 = vrot.slane %v509, 1
    %v516 = vadd.f32 %v505, %v512
    %v517 = vadd.f32 %v506, %v513
    %v518 = vstv %s113
    %v519 = vmul.f32 %v518, %v316
    %v520 = vmul.f32 %v518, %v317
    %v521 = vadd.f32 %v516, %v519
    %v522 = vadd.f32 %v517, %v520
    %v523 = vstv %s114
    %v524 = vmul.f32 %v523, %v316
    %v525 = vmul.f32 %v523, %v317
    %v528 = vrot.slane %v524, 1
    %v529 = vrot.slane %v525, 1
    %v532 = vadd.f32 %v521, %v528
    %v533 = vadd.f32 %v522, %v529
    %v534 = vstv %s115
    %v535 = vmul.f32 %v534, %v403
    %v536 = vmul.f32 %v534, %v404
    %v537 = vadd.f32 %v532, %v535
    %v538 = vadd.f32 %v533, %v536
    %v539 = vstv %s116
    %v540 = vmul.f32 %v539, %v403
    %v541 = vmul.f32 %v539, %v404
    %v544 = vrot.slane %v540, 1
    %v545 = vrot.slane %v541, 1
    %v548 = vadd.f32 %v537, %v544
    %v549 = vadd.f32 %v538, %v545
    %v550 = vstv %s117
    %v551 = vmul.f32 %v550, %v420
    %v552 = vmul.f32 %v550, %v421
    %v553 = vadd.f32 %v548, %v551
    %v554 = vadd.f32 %v549, %v552
    %v555 = vstv %s118
    %v556 = vmul.f32 %v555, %v420
    %v557 = vmul.f32 %v555, %v421
    %v560 = vrot.slane %v556, 1
    %v561 = vrot.slane %v557, 1
    %v564 = vadd.f32 %v553, %v560
    %v565 = vadd.f32 %v554, %v561
    %v566 = vstv %s119
    %v567 = vmul.f32 %v566, %v437
    %v568 = vmul.f32 %v566, %v438
    %v569 = vadd.f32 %v564, %v567
    %v570 = vadd.f32 %v565, %v568
    %v571 = vstv %s120
    %v572 = vmul.f32 %v571, %v437
    %v573 = vmul.f32 %v571, %v438
    %v576 = vrot.slane %v572, 1
    %v577 = vrot.slane %v573, 1
    %v580 = vadd.f32 %v569, %v576
    %v581 = vadd.f32 %v570, %v577
    %v582 = vstv %s121
    %v583 = vmul.f32 %v582, %v454
    %v584 = vmul.f32 %v582, %v455
    %v585 = vadd.f32 %v580, %v583
    %v586 = vadd.f32 %v581, %v584
    %v587 = vstv %s122
    %v588 = vmul.f32 %v587, %v454
    %v589 = vmul.f32 %v587, %v455
    %v592 = vrot.slane %v588, 1
    %v593 = vrot.slane %v589, 1
    %v596 = vadd.f32 %v585, %v592
    %v597 = vadd.f32 %v586, %v593
    %v598 = vstv %s123
    %v599 = vmul.f32 %v598, %v335
    %v600 = vmul.f32 %v598, %v336
    %v601 = vstv %s124
    %v602 = vmul.f32 %v601, %v335
    %v603 = vmul.f32 %v601, %v336
    %v606 = vrot.slane %v602, 1
    %v607 = vrot.slane %v603, 1
    %v610 = vadd.f32 %v599, %v606
    %v611 = vadd.f32 %v600, %v607
    %v612 = vstv %s125
    %v613 = vmul.f32 %v612, %v352
    %v614 = vmul.f32 %v612, %v353
    %v615 = vadd.f32 %v610, %v613
    %v616 = vadd.f32 %v611, %v614
    %v617 = vstv %s126
    %v618 = vmul.f32 %v617, %v352
    %v619 = vmul.f32 %v617, %v353
    %v622 = vrot.slane %v618, 1
    %v623 = vrot.slane %v619, 1
    %v626 = vadd.f32 %v615, %v622
    %v627 = vadd.f32 %v616, %v623
    %v628 = vstv %s127
    %v629 = vmul.f32 %v628, %v369
    %v630 = vmul.f32 %v628, %v370
    %v631 = vadd.f32 %v626, %v629
    %v632 = vadd.f32 %v627, %v630
    %v633 = vstv %s128
    %v634 = vmul.f32 %v633, %v369
    %v635 = vmul.f32 %v633, %v370
    %v638 = vrot.slane %v634, 1
    %v639 = vrot.slane %v635, 1
    %v642 = vadd.f32 %v631, %v638
    %v643 = vadd.f32 %v632, %v639
    %v644 = vstv %s129
    %v645 = vmul.f32 %v644, %v386
    %v646 = vmul.f32 %v644, %v387
    %v647 = vadd.f32 %v642, %v645
    %v648 = vadd.f32 %v643, %v646
    %v649 = vstv %s130
    %v650 = vmul.f32 %v649, %v386
    %v651 = vmul.f32 %v649, %v387
    %v654 = vrot.slane %v650, 1
    %v655 = vrot.slane %v651, 1
    %v658 = vadd.f32 %v647, %v654
    %v659 = vadd.f32 %v648, %v655
    %v660 = vstv %s131
    %v661 = vmul.f32 %v660, %v316
    %v662 = vmul.f32 %v660, %v317
    %v663 = vadd.f32 %v658, %v661
    %v664 = vadd.f32 %v659, %v662
    %v665 = vstv %s132
    %v666 = vmul.f32 %v665, %v316
    %v667 = vmul.f32 %v665, %v317
    %v670 = vrot.slane %v666, 1
    %v671 = vrot.slane %v667, 1
    %v674 = vadd.f32 %v663, %v670
    %v675 = vadd.f32 %v664, %v671
    %v676 = vstv %s133
    %v677 = vmul.f32 %v676, %v403
    %v678 = vmul.f32 %v676, %v404
    %v679 = vadd.f32 %v674, %v677
    %v680 = vadd.f32 %v675, %v678
    %v681 = vstv %s134
    %v682 = vmul.f32 %v681, %v403
    %v683 = vmul.f32 %v681, %v404
    %v686 = vrot.slane %v682, 1
    %v687 = vrot.slane %v683, 1
    %v690 = vadd.f32 %v679, %v686
    %v691 = vadd.f32 %v680, %v687
    %v692 = vstv %s135
    %v693 = vmul.f32 %v692, %v420
    %v694 = vmul.f32 %v692, %v421
    %v695 = vadd.f32 %v690, %v693
    %v696 = vadd.f32 %v691, %v694
    %v697 = vstv %s136
    %v698 = vmul.f32 %v697, %v420
    %v699 = vmul.f32 %v697, %v421
    %v702 = vrot.slane %v698, 1
    %v703 = vrot.slane %v699, 1
    %v706 = vadd.f32 %v695, %v702
    %v707 = vadd.f32 %v696, %v703
    %v708 = vstv %s137
    %v709 = vmul.f32 %v708, %v437
    %v710 = vmul.f32 %v708, %v438
    %v711 = vadd.f32 %v706, %v709
    %v712 = vadd.f32 %v707, %v710
    %v713 = vstv %s138
    %v714 = vmul.f32 %v713, %v437
    %v715 = vmul.f32 %v713, %v438
    %v718 = vrot.slane %v714, 1
    %v719 = vrot.slane %v715, 1
    %v722 = vadd.f32 %v711, %v718
    %v723 = vadd.f32 %v712, %v719
    %v724 = vstv %s139
    %v725 = vmul.f32 %v724, %v454
    %v726 = vmul.f32 %v724, %v455
    %v727 = vadd.f32 %v722, %v725
    %v728 = vadd.f32 %v723, %v726
    %v729 = vstv %s140
    %v730 = vmul.f32 %v729, %v454
    %v731 = vmul.f32 %v729, %v455
    %v734 = vrot.slane %v730, 1
    %v735 = vrot.slane %v731, 1
    %v738 = vadd.f32 %v727, %v734
    %v739 = vadd.f32 %v728, %v735
    %v740 = vstv %s141
    %v741 = vmul.f32 %v740, %v335
    %v742 = vmul.f32 %v740, %v336
    %v743 = vstv %s142
    %v744 = vmul.f32 %v743, %v335
    %v745 = vmul.f32 %v743, %v336
    %v748 = vrot.slane %v744, 1
    %v749 = vrot.slane %v745, 1
    %v752 = vadd.f32 %v741, %v748
    %v753 = vadd.f32 %v742, %v749
    %v754 = vstv %s143
    %v755 = vmul.f32 %v754, %v352
    %v756 = vmul.f32 %v754, %v353
    %v757 = vadd.f32 %v752, %v755
    %v758 = vadd.f32 %v753, %v756
    %v759 = vstv %s144
    %v760 = vmul.f32 %v759, %v352
    %v761 = vmul.f32 %v759, %v353
    %v764 = vrot.slane %v760, 1
    %v765 = vrot.slane %v761, 1
    %v768 = vadd.f32 %v757, %v764
    %v769 = vadd.f32 %v758, %v765
    %v770 = vstv %s145
    %v771 = vmul.f32 %v770, %v369
    %v772 = vmul.f32 %v770, %v370
    %v773 = vadd.f32 %v768, %v771
    %v774 = vadd.f32 %v769, %v772
    %v775 = vstv %s146
    %v776 = vmul.f32 %v775, %v369
    %v777 = vmul.f32 %v775, %v370
    %v780 = vrot.slane %v776, 1
    %v781 = vrot.slane %v777, 1
    %v784 = vadd.f32 %v773, %v780
    %v785 = vadd.f32 %v774, %v781
    %v786 = vstv %s147
    %v787 = vmul.f32 %v786, %v386
    %v788 = vmul.f32 %v786, %v387
    %v789 = vadd.f32 %v784, %v787
    %v790 = vadd.f32 %v785, %v788
    %v791 = vstv %s148
    %v792 = vmul.f32 %v791, %v386
    %v793 = vmul.f32 %v791, %v387
    %v796 = vrot.slane %v792, 1
    %v797 = vrot.slane %v793, 1
    %v800 = vadd.f32 %v789, %v796
    %v801 = vadd.f32 %v790, %v797
    %v802 = vstv %s149
    %v803 = vmul.f32 %v802, %v316
    %v804 = vmul.f32 %v802, %v317
    %v805 = vadd.f32 %v800, %v803
    %v806 = vadd.f32 %v801, %v804
    %v807 = vstv %s150
    %v808 = vmul.f32 %v807, %v316
    %v809 = vmul.f32 %v807, %v317
    %v812 = vrot.slane %v808, 1
    %v813 = vrot.slane %v809, 1
    %v816 = vadd.f32 %v805, %v812
    %v817 = vadd.f32 %v806, %v813
    %v818 = vstv %s151
    %v819 = vmul.f32 %v818, %v403
    %v820 = vmul.f32 %v818, %v404
    %v821 = vadd.f32 %v816, %v819
    %v822 = vadd.f32 %v817, %v820
    %v823 = vstv %s152
    %v824 = vmul.f32 %v823, %v403
    %v825 = vmul.f32 %v823, %v404
    %v828 = vrot.slane %v824, 1
    %v829 = vrot.slane %v825, 1
    %v832 = vadd.f32 %v821, %v828
    %v833 = vadd.f32 %v822, %v829
    %v834 = vstv %s153
    %v835 = vmul.f32 %v834, %v420
    %v836 = vmul.f32 %v834, %v421
    %v837 = vadd.f32 %v832, %v835
    %v838 = vadd.f32 %v833, %v836
    %v839 = vstv %s154
    %v840 = vmul.f32 %v839, %v420
    %v841 = vmul.f32 %v839, %v421
    %v844 = vrot.slane %v840, 1
    %v845 = vrot.slane %v841, 1
    %v848 = vadd.f32 %v837, %v844
    %v849 = vadd.f32 %v838, %v845
    %v850 = vstv %s155
    %v851 = vmul.f32 %v850, %v437
    %v852 = vmul.f32 %v850, %v438
    %v853 = vadd.f32 %v848, %v851
    %v854 = vadd.f32 %v849, %v852
    %v855 = vstv %s156
    %v856 = vmul.f32 %v855, %v437
    %v857 = vmul.f32 %v855, %v438
    %v860 = vrot.slane %v856, 1
    %v861 = vrot.slane %v857, 1
    %v864 = vadd.f32 %v853, %v860
    %v865 = vadd.f32 %v854, %v861
    %v866 = vstv %s157
    %v867 = vmul.f32 %v866, %v454
    %v868 = vmul.f32 %v866, %v455
    %v869 = vadd.f32 %v864, %v867
    %v870 = vadd.f32 %v865, %v868
    %v871 = vstv %s158
    %v872 = vmul.f32 %v871, %v454
    %v873 = vmul.f32 %v871, %v455
    %v876 = vrot.slane %v872, 1
    %v877 = vrot.slane %v873, 1
    %v880 = vadd.f32 %v869, %v876
    %v881 = vadd.f32 %v870, %v877
    %v882 = vstv %s159
    %v883 = vmul.f32 %v882, %v335
    %v884 = vmul.f32 %v882, %v336
    %v885 = vstv %s160
    %v886 = vmul.f32 %v885, %v335
    %v887 = vmul.f32 %v885, %v336
    %v890 = vrot.slane %v886, 1
    %v891 = vrot.slane %v887, 1
    %v894 = vadd.f32 %v883, %v890
    %v895 = vadd.f32 %v884, %v891
    %v896 = vstv %s161
    %v897 = vmul.f32 %v896, %v352
    %v898 = vmul.f32 %v896, %v353
    %v899 = vadd.f32 %v894, %v897
    %v900 = vadd.f32 %v895, %v898
    %v901 = vstv %s162
    %v902 = vmul.f32 %v901, %v352
    %v903 = vmul.f32 %v901, %v353
    %v906 = vrot.slane %v902, 1
    %v907 = vrot.slane %v903, 1
    %v910 = vadd.f32 %v899, %v906
    %v911 = vadd.f32 %v900, %v907
    %v912 = vstv %s163
    %v913 = vmul.f32 %v912, %v369
    %v914 = vmul.f32 %v912, %v370
    %v915 = vadd.f32 %v910, %v913
    %v916 = vadd.f32 %v911, %v914
    %v917 = vstv %s164
    %v918 = vmul.f32 %v917, %v369
    %v919 = vmul.f32 %v917, %v370
    %v922 = vrot.slane %v918, 1
    %v923 = vrot.slane %v919, 1
    %v926 = vadd.f32 %v915, %v922
    %v927 = vadd.f32 %v916, %v923
    %v928 = vstv %s165
    %v929 = vmul.f32 %v928, %v386
    %v930 = vmul.f32 %v928, %v387
    %v931 = vadd.f32 %v926, %v929
    %v932 = vadd.f32 %v927, %v930
    %v933 = vstv %s166
    %v934 = vmul.f32 %v933, %v386
    %v935 = vmul.f32 %v933, %v387
    %v938 = vrot.slane %v934, 1
    %v939 = vrot.slane %v935, 1
    %v942 = vadd.f32 %v931, %v938
    %v943 = vadd.f32 %v932, %v939
    %v944 = vstv %s167
    %v945 = vmul.f32 %v944, %v316
    %v946 = vmul.f32 %v944, %v317
    %v947 = vadd.f32 %v942, %v945
    %v948 = vadd.f32 %v943, %v946
    %v949 = vstv %s168
    %v950 = vmul.f32 %v949, %v316
    %v951 = vmul.f32 %v949, %v317
    %v954 = vrot.slane %v950, 1
    %v955 = vrot.slane %v951, 1
    %v958 = vadd.f32 %v947, %v954
    %v959 = vadd.f32 %v948, %v955
    %v960 = vstv %s169
    %v961 = vmul.f32 %v960, %v403
    %v962 = vmul.f32 %v960, %v404
    %v963 = vadd.f32 %v958, %v961
    %v964 = vadd.f32 %v959, %v962
    %v965 = vstv %s170
    %v966 = vmul.f32 %v965, %v403
    %v967 = vmul.f32 %v965, %v404
    %v970 = vrot.slane %v966, 1
    %v971 = vrot.slane %v967, 1
    %v974 = vadd.f32 %v963, %v970
    %v975 = vadd.f32 %v964, %v971
    %v976 = vstv %s171
    %v977 = vmul.f32 %v976, %v420
    %v978 = vmul.f32 %v976, %v421
    %v979 = vadd.f32 %v974, %v977
    %v980 = vadd.f32 %v975, %v978
    %v981 = vstv %s172
    %v982 = vmul.f32 %v981, %v420
    %v983 = vmul.f32 %v981, %v421
    %v986 = vrot.slane %v982, 1
    %v987 = vrot.slane %v983, 1
    %v990 = vadd.f32 %v979, %v986
    %v991 = vadd.f32 %v980, %v987
    %v992 = vstv %s173
    %v993 = vmul.f32 %v992, %v437
    %v994 = vmul.f32 %v992, %v438
    %v995 = vadd.f32 %v990, %v993
    %v996 = vadd.f32 %v991, %v994
    %v997 = vstv %s174
    %v998 = vmul.f32 %v997, %v437
    %v999 = vmul.f32 %v997, %v438
    %v1002 = vrot.slane %v998, 1
    %v1003 = vrot.slane %v999, 1
    %v1006 = vadd.f32 %v995, %v1002
    %v1007 = vadd.f32 %v996, %v1003
    %v1008 = vstv %s175
    %v1009 = vmul.f32 %v1008, %v454
    %v1010 = vmul.f32 %v1008, %v455
    %v1011 = vadd.f32 %v1006, %v1009
    %v1012 = vadd.f32 %v1007, %v1010
    %v1013 = vstv %s176
    %v1014 = vmul.f32 %v1013, %v454
    %v1015 = vmul.f32 %v1013, %v455
    %v1018 = vrot.slane %v1014, 1
    %v1019 = vrot.slane %v1015, 1
    %v1022 = vadd.f32 %v1011, %v1018
    %v1023 = vadd.f32 %v1012, %v1019
    %v1026 = vrot.slane %v738, 7
    %v1027 = vrot.slane %v739, 7
    %v1032 = vrot.slane %v880, 6
    %v1033 = vrot.slane %v881, 6
    %v1038 = vrot.slane %v1022, 5
    %v1039 = vrot.slane %v1023, 5
    %v1044 = vrot.slane %v596, 6
    %v1045 = vrot.slane %v597, 6
    %v1048 = vrot.slane %v738, 5
    %v1049 = vrot.slane %v739, 5
    %v1052 = vrot.slane %v880, 4
    %v1053 = vrot.slane %v881, 4
    %v1056 = vrot.slane %v1022, 3
    %v1057 = vrot.slane %v1023, 3
    %v1060 = vsel %vm309, %v596, %v1026
    %v1061 = vsel %vm309, %v597, %v1027
    %v1062 = vsel %vm312, %v1060, %v1032
    %v1063 = vsel %vm312, %v1061, %v1033
    %v1064 = vsel %vm315, %v1062, %v1038
    %v1065 = vsel %vm315, %v1063, %v1039
    %vm1066 = vcmask 1043456
    %v1067 = vsel %vm1066, %v1064, %v1044
    %v1068 = vsel %vm1066, %v1065, %v1045
    %vm1069 = vcmask 1044480
    %v1070 = vsel %vm1069, %v1067, %v1048
    %v1071 = vsel %vm1069, %v1068, %v1049
    %vm1072 = vcmask 1045504
    %v1073 = vsel %vm1072, %v1070, %v1052
    %v1074 = vsel %vm1072, %v1071, %v1053
    %vm1075 = vcmask 1046528
    %v1076 = vsel %vm1075, %v1073, %v1056
    %v1077 = vsel %vm1075, %v1074, %v1057
    %v1078 = vxor.u32 %v1076, 2147483648
    %v1079 = vxor.u32 %v1077, 2147483648
    %v1080 = vmul.f32 %v1078, 1.442695
    %v1081 = vpow.pop %v1080
    %v1082 = vmul.f32 %v1079, 1.442695
    %v1083 = vpow.pop %v1082
    %v1084 = vadd.f32 %v1081, 1.0
    %v1085 = vadd.f32 %v1083, 1.0
    %v1086 = vrcp.pop %v1084
    %v1087 = vmul.f32 1.0, %v1086
    %v1088 = vrcp.pop %v1085
    %v1089 = vmul.f32 1.0, %v1088
    %v1090 = vmul.f32 %v1087, %v85
    %v1091 = vmul.f32 %v1089, %v86
    %v1092 = vadd.f32 %v1090, %v83
    %v1093 = vadd.f32 %v1091, %v84
    %1094 = vst [vmem:[#allocation13] sm:$0xff] %v1092
    %1095 = vst [vmem:[#allocation13 + $0x8] sm:$0xff] %v1093
    // Predicated region
    $region46: #{tpu_custom_call.1} parent=1 // pred_check
      _
    $region47: #{tpu_custom_call.1} parent=1 // pred_check_branch
      %1097 = sbr.rel (0) target = $region49
    $region48: #{tpu_custom_call.1} parent=1 // pred_region
      %s1099 = ssub.s32 256, 256
      %1100 = vsyncadd [#allocation4], %s1099
      %s1102 = sshll.u32 [#allocation13], 4
      %s1103 = int_to_ptr.vmem [resolvable:$true] %s1102
      %1105 = dma.vmem_to_hbm [thread:$0]  %s1103, 256, %s6, [#allocation4]
    $region49: #{tpu_custom_call.1} parent=1 // pred_fallthru
      _
    // Predicated region
    $region50: #{tpu_custom_call.1} parent=1 // pred_check
      _
    $region51: #{tpu_custom_call.1} parent=1 // pred_check_branch
      %1107 = sbr.rel (0) target = $region53
    $region52: #{tpu_custom_call.1} parent=1 // pred_region
      %1108 = dma.done [#allocation4], 256
    $region53: #{tpu_custom_call.1} parent=1 // pred_fallthru
      _
    %1109 = vsyncpa [#allocation3], 1
    %1110 = vsyncpa [#allocation8], 1
    %1111 = vsyncpa [#allocation4], 1
    %1112 = vsyncpa [#allocation5], 1
    %1113 = vsyncpa [#allocation6], 1
    %1114 = vsyncpa [#allocation11], 1

</llo_original>
